<compile_context>
chip_gen: v5e
topology: v5e:2x2
jax: 0.10.0
libtpu: 0.0.40
codegen_flags: <defaults>
</compile_context>

<pallas_src>
import jax
import jax.numpy as jnp
import numpy as np
from jax.experimental import pallas as pl
from jax.experimental.pallas import tpu as pltpu

_PER_LAYER_REFS = 4  # w_ih_t (in,3H), w_hh_t (H,3H), b_gi (1,3H), b_hn (1,H)


# ----------------------------------------------------------------------------
# Fused kernel: all GRU layers + all timesteps + fc + log-softmax.
# ----------------------------------------------------------------------------
def _make_fused_kernel(num_layers, seq_len, batch, hidden_size):
    def kernel(*refs):
        x_ref, h0_ref = refs[0], refs[1]
        layer_refs = [refs[2 + _PER_LAYER_REFS * l: 2 + _PER_LAYER_REFS * (l + 1)]
                      for l in range(num_layers)]
        fcw_ref = refs[2 + _PER_LAYER_REFS * num_layers]
        fcb_ref = refs[3 + _PER_LAYER_REFS * num_layers]
        logp_ref = refs[4 + _PER_LAYER_REFS * num_layers]
        hout_ref = refs[5 + _PER_LAYER_REFS * num_layers]
        act_ref = refs[6 + _PER_LAYER_REFS * num_layers]   # (S*B, H) f32 scratch

        f32, bf16 = jnp.float32, jnp.bfloat16
        H, B, S = hidden_size, batch, seq_len

        feat_rows = []
        for l in range(num_layers):
            w_ih_ref, w_hh_ref, b_gi_ref, b_hn_ref = layer_refs[l]

            # Batched input->hidden projection for ALL timesteps: one MXU matmul,
            # off the serial recurrence path. r/z/(in) biases folded in here.
            xin = x_ref[...] if l == 0 else act_ref[...]            # (S*B, in_l) f32
            gi = jnp.dot(xin.astype(bf16), w_ih_ref[...],
                         preferred_element_type=f32) + b_gi_ref[...]  # (S*B, 3H)

            # Per-layer hoists only (bounded live range).
            w_hh = w_hh_ref[...]                                    # (H, 3H) bf16
            b_hn = jnp.broadcast_to(b_hn_ref[...], (B, H))          # (B, H) f32

            h = h0_ref[l].astype(f32)                               # (B, H)
            last = (l == num_layers - 1)

            for t in range(S):                 # serial recurrence: 1 matmul/step
                gh = jnp.dot(h.astype(bf16), w_hh,
                             preferred_element_type=f32)            # (B, 3H)
                gi_t = gi[t * B:(t + 1) * B, :]
                r = jax.nn.sigmoid(gi_t[:, 0:H] + gh[:, 0:H])
                z = jax.nn.sigmoid(gi_t[:, H:2 * H] + gh[:, H:2 * H])
                n = jnp.tanh(gi_t[:, 2 * H:3 * H] + r * (gh[:, 2 * H:3 * H] + b_hn))
                h = (1.0 - z) * n + z * h
                if last:
                    # faithful to output[:, -1, :]: last batch row, every timestep
                    feat_rows.append(h[B - 1:B, :])
                else:
                    act_ref[t * B:(t + 1) * B, :] = h
            hout_ref[l] = h.astype(hout_ref.dtype)

        # fc + LogSoftmax(dim=1), fused tail (bf16 MXU operands, f32 accumulation).
        feat = jnp.concatenate(feat_rows, axis=0)                   # (S, H) f32
        y = jnp.dot(feat.astype(bf16), fcw_ref[...],
                    preferred_element_type=f32) + fcb_ref[...]       # (S, O)
        m = jnp.max(y, axis=1, keepdims=True)
        lse = jnp.log(jnp.sum(jnp.exp(y - m), axis=1, keepdims=True)) + m
        logp_ref[...] = (y - lse).astype(logp_ref.dtype)

    return kernel


def _full_spec(shape):
    nd = len(shape)
    return pl.BlockSpec(shape, lambda: (0,) * nd)


def gru_module_forward(params, inputs, hidden):
    """Mirrors GRU.forward: returns (log_probs, new_hidden)."""
    S, B, I = inputs.shape
    layers = params["layers"]
    L = len(layers)
    H = hidden.shape[-1]
    O = params["fc_w_t"].shape[1]

    x_flat = inputs.reshape(S * B, I)          # free XLA reshape outside the kernel

    flat = [x_flat, hidden]
    for layer in layers:
        flat.extend([layer["w_ih_t"], layer["w_hh_t"], layer["b_gi"], layer["b_hn"]])
    flat.extend([params["fc_w_t"], params["fc_b"]])

    out_shape = (jax.ShapeDtypeStruct((S, O), jnp.float32),
                 jax.ShapeDtypeStruct((L, B, H), jnp.float32))

    log_probs, new_hidden = pl.pallas_call(
        _make_fused_kernel(L, S, B, H),
        out_shape=out_shape,
        grid=(),
        in_specs=[_full_spec(a.shape) for a in flat],
        out_specs=(_full_spec((S, O)), _full_spec((L, B, H))),
        scratch_shapes=[pltpu.VMEM((S * B, H), jnp.float32)],
        compiler_params=pltpu.CompilerParams(vmem_limit_bytes=32 * 1024 * 1024),
    )(*flat)
    return log_probs, new_hidden


# ----------------------------------------------------------------------------
# Parameter init (PyTorch-style uniform +/- 1/sqrt(H)), fused-gate layout.
# Gate order along the 3H axis matches torch: [r | z | n].
# ----------------------------------------------------------------------------
def init_params(key, input_size, hidden_size, num_layers, output_size):
    H = hidden_size
    k = 1.0 / np.sqrt(H)
    layers = []
    for l in range(num_layers):
        in_sz = input_size if l == 0 else hidden_size
        key, k1, k2, k3, k4 = jax.random.split(key, 5)
        w_ih = jax.random.uniform(k1, (3 * H, in_sz), jnp.float32, -k, k)
        w_hh = jax.random.uniform(k2, (3 * H, H), jnp.float32, -k, k)
        b_ih = jax.random.uniform(k3, (3 * H,), jnp.float32, -k, k)
        b_hh = jax.random.uniform(k4, (3 * H,), jnp.float32, -k, k)
        # fused (in, 3H) / (H, 3H), bf16 for the MXU (f32 accumulation in-kernel)
        w_ih_t = w_ih.T.astype(jnp.bfloat16)
        w_hh_t = w_hh.T.astype(jnp.bfloat16)
        # r/z biases combined (b_ih + b_hh) and b_in -> folded into the batched
        # ih projection; b_hn must stay separate (multiplied by r).
        b_gi = jnp.concatenate([b_ih[0:H] + b_hh[0:H],
                                b_ih[H:2 * H] + b_hh[H:2 * H],
                                b_ih[2 * H:3 * H]]).reshape(1, 3 * H)
        b_hn = b_hh[2 * H:3 * H].reshape(1, H)
        layers.append(dict(w_ih_t=w_ih_t, w_hh_t=w_hh_t, b_gi=b_gi, b_hn=b_hn))
    key, k5, k6 = jax.random.split(key, 3)
    fc_w = jax.random.uniform(k5, (output_size, hidden_size), jnp.float32, -k, k)
    fc_b = jax.random.uniform(k6, (output_size,), jnp.float32, -k, k)
    return dict(layers=layers,
                fc_w_t=fc_w.T.astype(jnp.bfloat16),
                fc_b=fc_b.reshape(1, -1))


# ----------------------------------------------------------------------------
# Pure-JAX reference (identical math: bf16 MXU operands, f32 everywhere else).
# ----------------------------------------------------------------------------
def _ref_forward(params, inputs, hidden):
    f32, bf16 = jnp.float32, jnp.bfloat16
    S, B, _ = inputs.shape
    H = hidden.shape[-1]
    x = inputs
    new_hidden = []
    for l, layer in enumerate(params["layers"]):
        gi = jnp.dot(x.reshape(S * B, -1).astype(bf16), layer["w_ih_t"],
                     preferred_element_type=f32) + layer["b_gi"]
        gi = gi.reshape(S, B, 3 * H)
        h = hidden[l].astype(f32)
        outs = []
        for t in range(S):
            gh = jnp.dot(h.astype(bf16), layer["w_hh_t"], preferred_element_type=f32)
            gt = gi[t]
            r = jax.nn.sigmoid(gt[:, 0:H] + gh[:, 0:H])
            z = jax.nn.sigmoid(gt[:, H:2 * H] + gh[:, H:2 * H])
            n = jnp.tanh(gt[:, 2 * H:3 * H] + r * (gh[:, 2 * H:3 * H] + layer["b_hn"]))
            h = (1.0 - z) * n + z * h
            outs.append(h)
        x = jnp.stack(outs, axis=0)
        new_hidden.append(h)
    feat = x[:, -1, :]                          # faithful to output[:, -1, :]
    y = jnp.dot(feat.astype(bf16), params["fc_w_t"],
                preferred_element_type=f32) + params["fc_b"]
    return jax.nn.log_softmax(y, axis=1), jnp.stack(new_hidden, axis=0)


if __name__ == "__main__":
    input_size, hidden_size, num_layers, output_size = 16, 32, 2, 10
    seq_len, batch = 8, 4

    key = jax.random.PRNGKey(0)
    key, kx = jax.random.split(key)
    params = init_params(key, input_size, hidden_size, num_layers, output_size)

    inputs = jax.random.normal(kx, (seq_len, batch, input_size), jnp.float32)
    hidden0 = jnp.zeros((num_layers, batch, hidden_size), jnp.float32)

    log_probs, new_hidden = gru_module_forward(params, inputs, hidden0)
    jax.block_until_ready((log_probs, new_hidden))

    ref_lp, ref_h = _ref_forward(params, inputs, hidden0)
    np.testing.assert_allclose(np.asarray(log_probs), np.asarray(ref_lp),
                               rtol=1e-3, atol=1e-3)
    np.testing.assert_allclose(np.asarray(new_hidden), np.asarray(ref_h),
                               rtol=1e-3, atol=1e-3)

    assert log_probs.shape == (seq_len, output_size)
    assert new_hidden.shape == (num_layers, batch, hidden_size)
    print("KERNEL_OK")
</pallas_src>

<mosaic_0001>
module attributes {stable_mosaic.version = 11 : i64} {
  func.func @kernel(%arg0: memref<32x16xf32, #tpu.memory_space<vmem>>, %arg1: memref<2x4x32xf32, #tpu.memory_space<vmem>>, %arg2: memref<16x96xbf16, #tpu.memory_space<vmem>>, %arg3: memref<32x96xbf16, #tpu.memory_space<vmem>>, %arg4: memref<1x96xf32, #tpu.memory_space<vmem>>, %arg5: memref<1x32xf32, #tpu.memory_space<vmem>>, %arg6: memref<32x96xbf16, #tpu.memory_space<vmem>>, %arg7: memref<32x96xbf16, #tpu.memory_space<vmem>>, %arg8: memref<1x96xf32, #tpu.memory_space<vmem>>, %arg9: memref<1x32xf32, #tpu.memory_space<vmem>>, %arg10: memref<32x10xbf16, #tpu.memory_space<vmem>>, %arg11: memref<1x10xf32, #tpu.memory_space<vmem>>, %arg12: memref<8x10xf32, #tpu.memory_space<vmem>>, %arg13: memref<2x4x32xf32, #tpu.memory_space<vmem>>, %arg14: memref<32x32xf32, #tpu.memory_space<vmem>>) attributes {dimension_semantics = [], scalar_prefetch = 0 : i64, scratch_operands = 1 : i64, tpu.core_type = #tpu.core_type<tc>} {
    %c0 = arith.constant 0 : index
    %c0_0 = arith.constant 0 : index
    %0 = vector.load %arg0[%c0, %c0_0] : memref<32x16xf32, #tpu.memory_space<vmem>>, vector<32x16xf32>
    %1 = arith.truncf %0 : vector<32x16xf32> to vector<32x16xbf16>
    %c0_1 = arith.constant 0 : index
    %c0_2 = arith.constant 0 : index
    %2 = vector.load %arg2[%c0_1, %c0_2] : memref<16x96xbf16, #tpu.memory_space<vmem>>, vector<16x96xbf16>
    %cst = arith.constant dense<0.000000e+00> : vector<32x96xf32>
    %3 = tpu.matmul %1, %2, %cst {dimension_numbers = #tpu.dot_dimension_numbers<[1], [0], [0], [1], [0, 0, 1, 1], [], []>} : vector<32x16xbf16>, vector<16x96xbf16>, vector<32x96xf32> -> vector<32x96xf32>
    %c0_3 = arith.constant 0 : index
    %c0_4 = arith.constant 0 : index
    %4 = vector.load %arg4[%c0_3, %c0_4] : memref<1x96xf32, #tpu.memory_space<vmem>>, vector<1x96xf32>
    %5 = vector.broadcast %4 : vector<1x96xf32> to vector<32x96xf32>
    %6 = arith.addf %3, %5 : vector<32x96xf32>
    %c0_5 = arith.constant 0 : index
    %c0_6 = arith.constant 0 : index
    %7 = vector.load %arg3[%c0_5, %c0_6] : memref<32x96xbf16, #tpu.memory_space<vmem>>, vector<32x96xbf16>
    %c0_7 = arith.constant 0 : index
    %c0_8 = arith.constant 0 : index
    %8 = vector.load %arg5[%c0_7, %c0_8] : memref<1x32xf32, #tpu.memory_space<vmem>>, vector<1x32xf32>
    %9 = vector.shape_cast %8 : vector<1x32xf32> to vector<1x32xf32>
    %10 = vector.broadcast %9 : vector<1x32xf32> to vector<4x32xf32>
    %c0_9 = arith.constant 0 : index
    %c0_10 = arith.constant 0 : index
    %c0_11 = arith.constant 0 : index
    %11 = vector.load %arg1[%c0_9, %c0_10, %c0_11] : memref<2x4x32xf32, #tpu.memory_space<vmem>>, vector<1x4x32xf32>
    %12 = vector.shape_cast %11 : vector<1x4x32xf32> to vector<4x32xf32>
    %13 = arith.truncf %12 : vector<4x32xf32> to vector<4x32xbf16>
    %cst_12 = arith.constant dense<0.000000e+00> : vector<4x96xf32>
    %14 = tpu.matmul %13, %7, %cst_12 {dimension_numbers = #tpu.dot_dimension_numbers<[1], [0], [0], [1], [0, 0, 1, 1], [], []>} : vector<4x32xbf16>, vector<32x96xbf16>, vector<4x96xf32> -> vector<4x96xf32>
    %15 = vector.extract_strided_slice %6 {offsets = [0, 0], sizes = [4, 96], strides = [1, 1]} : vector<32x96xf32> to vector<4x96xf32>
    %16 = vector.extract_strided_slice %15 {offsets = [0, 0], sizes = [4, 32], strides = [1, 1]} : vector<4x96xf32> to vector<4x32xf32>
    %17 = vector.extract_strided_slice %14 {offsets = [0, 0], sizes = [4, 32], strides = [1, 1]} : vector<4x96xf32> to vector<4x32xf32>
    %18 = arith.addf %16, %17 : vector<4x32xf32>
    %19 = arith.negf %18 : vector<4x32xf32>
    %20 = math.exp %19 : vector<4x32xf32>
    %cst_13 = arith.constant 1.000000e+00 : f32
    %21 = vector.broadcast %cst_13 : f32 to vector<4x32xf32>
    %22 = arith.addf %21, %20 : vector<4x32xf32>
    %23 = arith.divf %21, %22 : vector<4x32xf32>
    %24 = vector.extract_strided_slice %15 {offsets = [0, 32], sizes = [4, 32], strides = [1, 1]} : vector<4x96xf32> to vector<4x32xf32>
    %25 = vector.extract_strided_slice %14 {offsets = [0, 32], sizes = [4, 32], strides = [1, 1]} : vector<4x96xf32> to vector<4x32xf32>
    %26 = arith.addf %24, %25 : vector<4x32xf32>
    %27 = arith.negf %26 : vector<4x32xf32>
    %28 = math.exp %27 : vector<4x32xf32>
    %cst_14 = arith.constant 1.000000e+00 : f32
    %29 = vector.broadcast %cst_14 : f32 to vector<4x32xf32>
    %30 = arith.addf %29, %28 : vector<4x32xf32>
    %31 = arith.divf %29, %30 : vector<4x32xf32>
    %32 = vector.extract_strided_slice %15 {offsets = [0, 64], sizes = [4, 32], strides = [1, 1]} : vector<4x96xf32> to vector<4x32xf32>
    %33 = vector.extract_strided_slice %14 {offsets = [0, 64], sizes = [4, 32], strides = [1, 1]} : vector<4x96xf32> to vector<4x32xf32>
    %34 = arith.addf %33, %10 : vector<4x32xf32>
    %35 = arith.mulf %23, %34 : vector<4x32xf32>
    %36 = arith.addf %32, %35 : vector<4x32xf32>
    %37 = math.tanh %36 : vector<4x32xf32>
    %cst_15 = arith.constant 1.000000e+00 : f32
    %38 = vector.broadcast %cst_15 : f32 to vector<4x32xf32>
    %39 = arith.subf %38, %31 : vector<4x32xf32>
    %40 = arith.mulf %39, %37 : vector<4x32xf32>
    %41 = arith.mulf %31, %12 : vector<4x32xf32>
    %42 = arith.addf %40, %41 : vector<4x32xf32>
    %c0_16 = arith.constant 0 : index
    %c0_17 = arith.constant 0 : index
    %43 = vector.load %arg14[%c0_16, %c0_17] : memref<32x32xf32, #tpu.memory_space<vmem>>, vector<4x32xf32>
    tpu.vector_store %arg14[%c0_16, %c0_17], %42 {strides = array<i32>} : memref<32x32xf32, #tpu.memory_space<vmem>>, vector<4x32xf32>,
    %44 = arith.truncf %42 : vector<4x32xf32> to vector<4x32xbf16>
    %cst_18 = arith.constant dense<0.000000e+00> : vector<4x96xf32>
    %45 = tpu.matmul %44, %7, %cst_18 {dimension_numbers = #tpu.dot_dimension_numbers<[1], [0], [0], [1], [0, 0, 1, 1], [], []>} : vector<4x32xbf16>, vector<32x96xbf16>, vector<4x96xf32> -> vector<4x96xf32>
    %46 = vector.extract_strided_slice %6 {offsets = [4, 0], sizes = [4, 96], strides = [1, 1]} : vector<32x96xf32> to vector<4x96xf32>
    %47 = vector.extract_strided_slice %46 {offsets = [0, 0], sizes = [4, 32], strides = [1, 1]} : vector<4x96xf32> to vector<4x32xf32>
    %48 = vector.extract_strided_slice %45 {offsets = [0, 0], sizes = [4, 32], strides = [1, 1]} : vector<4x96xf32> to vector<4x32xf32>
    %49 = arith.addf %47, %48 : vector<4x32xf32>
    %50 = arith.negf %49 : vector<4x32xf32>
    %51 = math.exp %50 : vector<4x32xf32>
    %cst_19 = arith.constant 1.000000e+00 : f32
    %52 = vector.broadcast %cst_19 : f32 to vector<4x32xf32>
    %53 = arith.addf %52, %51 : vector<4x32xf32>
    %54 = arith.divf %52, %53 : vector<4x32xf32>
    %55 = vector.extract_strided_slice %46 {offsets = [0, 32], sizes = [4, 32], strides = [1, 1]} : vector<4x96xf32> to vector<4x32xf32>
    %56 = vector.extract_strided_slice %45 {offsets = [0, 32], sizes = [4, 32], strides = [1, 1]} : vector<4x96xf32> to vector<4x32xf32>
    %57 = arith.addf %55, %56 : vector<4x32xf32>
    %58 = arith.negf %57 : vector<4x32xf32>
    %59 = math.exp %58 : vector<4x32xf32>
    %cst_20 = arith.constant 1.000000e+00 : f32
    %60 = vector.broadcast %cst_20 : f32 to vector<4x32xf32>
    %61 = arith.addf %60, %59 : vector<4x32xf32>
    %62 = arith.divf %60, %61 : vector<4x32xf32>
    %63 = vector.extract_strided_slice %46 {offsets = [0, 64], sizes = [4, 32], strides = [1, 1]} : vector<4x96xf32> to vector<4x32xf32>
    %64 = vector.extract_strided_slice %45 {offsets = [0, 64], sizes = [4, 32], strides = [1, 1]} : vector<4x96xf32> to vector<4x32xf32>
    %65 = arith.addf %64, %10 : vector<4x32xf32>
    %66 = arith.mulf %54, %65 : vector<4x32xf32>
    %67 = arith.addf %63, %66 : vector<4x32xf32>
    %68 = math.tanh %67 : vector<4x32xf32>
    %cst_21 = arith.constant 1.000000e+00 : f32
    %69 = vector.broadcast %cst_21 : f32 to vector<4x32xf32>
    %70 = arith.subf %69, %62 : vector<4x32xf32>
    %71 = arith.mulf %70, %68 : vector<4x32xf32>
    %72 = arith.mulf %62, %42 : vector<4x32xf32>
    %73 = arith.addf %71, %72 : vector<4x32xf32>
    %c4 = arith.constant 4 : index
    %c0_22 = arith.constant 0 : index
    %74 = vector.load %arg14[%c4, %c0_22] : memref<32x32xf32, #tpu.memory_space<vmem>>, vector<4x32xf32>
    tpu.vector_store %arg14[%c4, %c0_22], %73 {strides = array<i32>} : memref<32x32xf32, #tpu.memory_space<vmem>>, vector<4x32xf32>,
    %75 = arith.truncf %73 : vector<4x32xf32> to vector<4x32xbf16>
    %cst_23 = arith.constant dense<0.000000e+00> : vector<4x96xf32>
    %76 = tpu.matmul %75, %7, %cst_23 {dimension_numbers = #tpu.dot_dimension_numbers<[1], [0], [0], [1], [0, 0, 1, 1], [], []>} : vector<4x32xbf16>, vector<32x96xbf16>, vector<4x96xf32> -> vector<4x96xf32>
    %77 = vector.extract_strided_slice %6 {offsets = [8, 0], sizes = [4, 96], strides = [1, 1]} : vector<32x96xf32> to vector<4x96xf32>
    %78 = vector.extract_strided_slice %77 {offsets = [0, 0], sizes = [4, 32], strides = [1, 1]} : vector<4x96xf32> to vector<4x32xf32>
    %79 = vector.extract_strided_slice %76 {offsets = [0, 0], sizes = [4, 32], strides = [1, 1]} : vector<4x96xf32> to vector<4x32xf32>
    %80 = arith.addf %78, %79 : vector<4x32xf32>
    %81 = arith.negf %80 : vector<4x32xf32>
    %82 = math.exp %81 : vector<4x32xf32>
    %cst_24 = arith.constant 1.000000e+00 : f32
    %83 = vector.broadcast %cst_24 : f32 to vector<4x32xf32>
    %84 = arith.addf %83, %82 : vector<4x32xf32>
    %85 = arith.divf %83, %84 : vector<4x32xf32>
    %86 = vector.extract_strided_slice %77 {offsets = [0, 32], sizes = [4, 32], strides = [1, 1]} : vector<4x96xf32> to vector<4x32xf32>
    %87 = vector.extract_strided_slice %76 {offsets = [0, 32], sizes = [4, 32], strides = [1, 1]} : vector<4x96xf32> to vector<4x32xf32>
    %88 = arith.addf %86, %87 : vector<4x32xf32>
    %89 = arith.negf %88 : vector<4x32xf32>
    %90 = math.exp %89 : vector<4x32xf32>
    %cst_25 = arith.constant 1.000000e+00 : f32
    %91 = vector.broadcast %cst_25 : f32 to vector<4x32xf32>
    %92 = arith.addf %91, %90 : vector<4x32xf32>
    %93 = arith.divf %91, %92 : vector<4x32xf32>
    %94 = vector.extract_strided_slice %77 {offsets = [0, 64], sizes = [4, 32], strides = [1, 1]} : vector<4x96xf32> to vector<4x32xf32>
    %95 = vector.extract_strided_slice %76 {offsets = [0, 64], sizes = [4, 32], strides = [1, 1]} : vector<4x96xf32> to vector<4x32xf32>
    %96 = arith.addf %95, %10 : vector<4x32xf32>
    %97 = arith.mulf %85, %96 : vector<4x32xf32>
    %98 = arith.addf %94, %97 : vector<4x32xf32>
    %99 = math.tanh %98 : vector<4x32xf32>
    %cst_26 = arith.constant 1.000000e+00 : f32
    %100 = vector.broadcast %cst_26 : f32 to vector<4x32xf32>
    %101 = arith.subf %100, %93 : vector<4x32xf32>
    %102 = arith.mulf %101, %99 : vector<4x32xf32>
    %103 = arith.mulf %93, %73 : vector<4x32xf32>
    %104 = arith.addf %102, %103 : vector<4x32xf32>
    %c8 = arith.constant 8 : index
    %c0_27 = arith.constant 0 : index
    %105 = vector.load %arg14[%c8, %c0_27] : memref<32x32xf32, #tpu.memory_space<vmem>>, vector<4x32xf32>
    tpu.vector_store %arg14[%c8, %c0_27], %104 {strides = array<i32>} : memref<32x32xf32, #tpu.memory_space<vmem>>, vector<4x32xf32>,
    %106 = arith.truncf %104 : vector<4x32xf32> to vector<4x32xbf16>
    %cst_28 = arith.constant dense<0.000000e+00> : vector<4x96xf32>
    %107 = tpu.matmul %106, %7, %cst_28 {dimension_numbers = #tpu.dot_dimension_numbers<[1], [0], [0], [1], [0, 0, 1, 1], [], []>} : vector<4x32xbf16>, vector<32x96xbf16>, vector<4x96xf32> -> vector<4x96xf32>
    %108 = vector.extract_strided_slice %6 {offsets = [12, 0], sizes = [4, 96], strides = [1, 1]} : vector<32x96xf32> to vector<4x96xf32>
    %109 = vector.extract_strided_slice %108 {offsets = [0, 0], sizes = [4, 32], strides = [1, 1]} : vector<4x96xf32> to vector<4x32xf32>
    %110 = vector.extract_strided_slice %107 {offsets = [0, 0], sizes = [4, 32], strides = [1, 1]} : vector<4x96xf32> to vector<4x32xf32>
    %111 = arith.addf %109, %110 : vector<4x32xf32>
    %112 = arith.negf %111 : vector<4x32xf32>
    %113 = math.exp %112 : vector<4x32xf32>
    %cst_29 = arith.constant 1.000000e+00 : f32
    %114 = vector.broadcast %cst_29 : f32 to vector<4x32xf32>
    %115 = arith.addf %114, %113 : vector<4x32xf32>
    %116 = arith.divf %114, %115 : vector<4x32xf32>
    %117 = vector.extract_strided_slice %108 {offsets = [0, 32], sizes = [4, 32], strides = [1, 1]} : vector<4x96xf32> to vector<4x32xf32>
    %118 = vector.extract_strided_slice %107 {offsets = [0, 32], sizes = [4, 32], strides = [1, 1]} : vector<4x96xf32> to vector<4x32xf32>
    %119 = arith.addf %117, %118 : vector<4x32xf32>
    %120 = arith.negf %119 : vector<4x32xf32>
    %121 = math.exp %120 : vector<4x32xf32>
    %cst_30 = arith.constant 1.000000e+00 : f32
    %122 = vector.broadcast %cst_30 : f32 to vector<4x32xf32>
    %123 = arith.addf %122, %121 : vector<4x32xf32>
    %124 = arith.divf %122, %123 : vector<4x32xf32>
    %125 = vector.extract_strided_slice %108 {offsets = [0, 64], sizes = [4, 32], strides = [1, 1]} : vector<4x96xf32> to vector<4x32xf32>
    %126 = vector.extract_strided_slice %107 {offsets = [0, 64], sizes = [4, 32], strides = [1, 1]} : vector<4x96xf32> to vector<4x32xf32>
    %127 = arith.addf %126, %10 : vector<4x32xf32>
    %128 = arith.mulf %116, %127 : vector<4x32xf32>
    %129 = arith.addf %125, %128 : vector<4x32xf32>
    %130 = math.tanh %129 : vector<4x32xf32>
    %cst_31 = arith.constant 1.000000e+00 : f32
    %131 = vector.broadcast %cst_31 : f32 to vector<4x32xf32>
    %132 = arith.subf %131, %124 : vector<4x32xf32>
    %133 = arith.mulf %132, %130 : vector<4x32xf32>
    %134 = arith.mulf %124, %104 : vector<4x32xf32>
    %135 = arith.addf %133, %134 : vector<4x32xf32>
    %c12 = arith.constant 12 : index
    %c0_32 = arith.constant 0 : index
    %136 = vector.load %arg14[%c12, %c0_32] : memref<32x32xf32, #tpu.memory_space<vmem>>, vector<4x32xf32>
    tpu.vector_store %arg14[%c12, %c0_32], %135 {strides = array<i32>} : memref<32x32xf32, #tpu.memory_space<vmem>>, vector<4x32xf32>,
    %137 = arith.truncf %135 : vector<4x32xf32> to vector<4x32xbf16>
    %cst_33 = arith.constant dense<0.000000e+00> : vector<4x96xf32>
    %138 = tpu.matmul %137, %7, %cst_33 {dimension_numbers = #tpu.dot_dimension_numbers<[1], [0], [0], [1], [0, 0, 1, 1], [], []>} : vector<4x32xbf16>, vector<32x96xbf16>, vector<4x96xf32> -> vector<4x96xf32>
    %139 = vector.extract_strided_slice %6 {offsets = [16, 0], sizes = [4, 96], strides = [1, 1]} : vector<32x96xf32> to vector<4x96xf32>
    %140 = vector.extract_strided_slice %139 {offsets = [0, 0], sizes = [4, 32], strides = [1, 1]} : vector<4x96xf32> to vector<4x32xf32>
    %141 = vector.extract_strided_slice %138 {offsets = [0, 0], sizes = [4, 32], strides = [1, 1]} : vector<4x96xf32> to vector<4x32xf32>
    %142 = arith.addf %140, %141 : vector<4x32xf32>
    %143 = arith.negf %142 : vector<4x32xf32>
    %144 = math.exp %143 : vector<4x32xf32>
    %cst_34 = arith.constant 1.000000e+00 : f32
    %145 = vector.broadcast %cst_34 : f32 to vector<4x32xf32>
    %146 = arith.addf %145, %144 : vector<4x32xf32>
    %147 = arith.divf %145, %146 : vector<4x32xf32>
    %148 = vector.extract_strided_slice %139 {offsets = [0, 32], sizes = [4, 32], strides = [1, 1]} : vector<4x96xf32> to vector<4x32xf32>
    %149 = vector.extract_strided_slice %138 {offsets = [0, 32], sizes = [4, 32], strides = [1, 1]} : vector<4x96xf32> to vector<4x32xf32>
    %150 = arith.addf %148, %149 : vector<4x32xf32>
    %151 = arith.negf %150 : vector<4x32xf32>
    %152 = math.exp %151 : vector<4x32xf32>
    %cst_35 = arith.constant 1.000000e+00 : f32
    %153 = vector.broadcast %cst_35 : f32 to vector<4x32xf32>
    %154 = arith.addf %153, %152 : vector<4x32xf32>
    %155 = arith.divf %153, %154 : vector<4x32xf32>
    %156 = vector.extract_strided_slice %139 {offsets = [0, 64], sizes = [4, 32], strides = [1, 1]} : vector<4x96xf32> to vector<4x32xf32>
    %157 = vector.extract_strided_slice %138 {offsets = [0, 64], sizes = [4, 32], strides = [1, 1]} : vector<4x96xf32> to vector<4x32xf32>
    %158 = arith.addf %157, %10 : vector<4x32xf32>
    %159 = arith.mulf %147, %158 : vector<4x32xf32>
    %160 = arith.addf %156, %159 : vector<4x32xf32>
    %161 = math.tanh %160 : vector<4x32xf32>
    %cst_36 = arith.constant 1.000000e+00 : f32
    %162 = vector.broadcast %cst_36 : f32 to vector<4x32xf32>
    %163 = arith.subf %162, %155 : vector<4x32xf32>
    %164 = arith.mulf %163, %161 : vector<4x32xf32>
    %165 = arith.mulf %155, %135 : vector<4x32xf32>
    %166 = arith.addf %164, %165 : vector<4x32xf32>
    %c16 = arith.constant 16 : index
    %c0_37 = arith.constant 0 : index
    %167 = vector.load %arg14[%c16, %c0_37] : memref<32x32xf32, #tpu.memory_space<vmem>>, vector<4x32xf32>
    tpu.vector_store %arg14[%c16, %c0_37], %166 {strides = array<i32>} : memref<32x32xf32, #tpu.memory_space<vmem>>, vector<4x32xf32>,
    %168 = arith.truncf %166 : vector<4x32xf32> to vector<4x32xbf16>
    %cst_38 = arith.constant dense<0.000000e+00> : vector<4x96xf32>
    %169 = tpu.matmul %168, %7, %cst_38 {dimension_numbers = #tpu.dot_dimension_numbers<[1], [0], [0], [1], [0, 0, 1, 1], [], []>} : vector<4x32xbf16>, vector<32x96xbf16>, vector<4x96xf32> -> vector<4x96xf32>
    %170 = vector.extract_strided_slice %6 {offsets = [20, 0], sizes = [4, 96], strides = [1, 1]} : vector<32x96xf32> to vector<4x96xf32>
    %171 = vector.extract_strided_slice %170 {offsets = [0, 0], sizes = [4, 32], strides = [1, 1]} : vector<4x96xf32> to vector<4x32xf32>
    %172 = vector.extract_strided_slice %169 {offsets = [0, 0], sizes = [4, 32], strides = [1, 1]} : vector<4x96xf32> to vector<4x32xf32>
    %173 = arith.addf %171, %172 : vector<4x32xf32>
    %174 = arith.negf %173 : vector<4x32xf32>
    %175 = math.exp %174 : vector<4x32xf32>
    %cst_39 = arith.constant 1.000000e+00 : f32
    %176 = vector.broadcast %cst_39 : f32 to vector<4x32xf32>
    %177 = arith.addf %176, %175 : vector<4x32xf32>
    %178 = arith.divf %176, %177 : vector<4x32xf32>
    %179 = vector.extract_strided_slice %170 {offsets = [0, 32], sizes = [4, 32], strides = [1, 1]} : vector<4x96xf32> to vector<4x32xf32>
    %180 = vector.extract_strided_slice %169 {offsets = [0, 32], sizes = [4, 32], strides = [1, 1]} : vector<4x96xf32> to vector<4x32xf32>
    %181 = arith.addf %179, %180 : vector<4x32xf32>
    %182 = arith.negf %181 : vector<4x32xf32>
    %183 = math.exp %182 : vector<4x32xf32>
    %cst_40 = arith.constant 1.000000e+00 : f32
    %184 = vector.broadcast %cst_40 : f32 to vector<4x32xf32>
    %185 = arith.addf %184, %183 : vector<4x32xf32>
    %186 = arith.divf %184, %185 : vector<4x32xf32>
    %187 = vector.extract_strided_slice %170 {offsets = [0, 64], sizes = [4, 32], strides = [1, 1]} : vector<4x96xf32> to vector<4x32xf32>
    %188 = vector.extract_strided_slice %169 {offsets = [0, 64], sizes = [4, 32], strides = [1, 1]} : vector<4x96xf32> to vector<4x32xf32>
    %189 = arith.addf %188, %10 : vector<4x32xf32>
    %190 = arith.mulf %178, %189 : vector<4x32xf32>
    %191 = arith.addf %187, %190 : vector<4x32xf32>
    %192 = math.tanh %191 : vector<4x32xf32>
    %cst_41 = arith.constant 1.000000e+00 : f32
    %193 = vector.broadcast %cst_41 : f32 to vector<4x32xf32>
    %194 = arith.subf %193, %186 : vector<4x32xf32>
    %195 = arith.mulf %194, %192 : vector<4x32xf32>
    %196 = arith.mulf %186, %166 : vector<4x32xf32>
    %197 = arith.addf %195, %196 : vector<4x32xf32>
    %c20 = arith.constant 20 : index
    %c0_42 = arith.constant 0 : index
    %198 = vector.load %arg14[%c20, %c0_42] : memref<32x32xf32, #tpu.memory_space<vmem>>, vector<4x32xf32>
    tpu.vector_store %arg14[%c20, %c0_42], %197 {strides = array<i32>} : memref<32x32xf32, #tpu.memory_space<vmem>>, vector<4x32xf32>,
    %199 = arith.truncf %197 : vector<4x32xf32> to vector<4x32xbf16>
    %cst_43 = arith.constant dense<0.000000e+00> : vector<4x96xf32>
    %200 = tpu.matmul %199, %7, %cst_43 {dimension_numbers = #tpu.dot_dimension_numbers<[1], [0], [0], [1], [0, 0, 1, 1], [], []>} : vector<4x32xbf16>, vector<32x96xbf16>, vector<4x96xf32> -> vector<4x96xf32>
    %201 = vector.extract_strided_slice %6 {offsets = [24, 0], sizes = [4, 96], strides = [1, 1]} : vector<32x96xf32> to vector<4x96xf32>
    %202 = vector.extract_strided_slice %201 {offsets = [0, 0], sizes = [4, 32], strides = [1, 1]} : vector<4x96xf32> to vector<4x32xf32>
    %203 = vector.extract_strided_slice %200 {offsets = [0, 0], sizes = [4, 32], strides = [1, 1]} : vector<4x96xf32> to vector<4x32xf32>
    %204 = arith.addf %202, %203 : vector<4x32xf32>
    %205 = arith.negf %204 : vector<4x32xf32>
    %206 = math.exp %205 : vector<4x32xf32>
    %cst_44 = arith.constant 1.000000e+00 : f32
    %207 = vector.broadcast %cst_44 : f32 to vector<4x32xf32>
    %208 = arith.addf %207, %206 : vector<4x32xf32>
    %209 = arith.divf %207, %208 : vector<4x32xf32>
    %210 = vector.extract_strided_slice %201 {offsets = [0, 32], sizes = [4, 32], strides = [1, 1]} : vector<4x96xf32> to vector<4x32xf32>
    %211 = vector.extract_strided_slice %200 {offsets = [0, 32], sizes = [4, 32], strides = [1, 1]} : vector<4x96xf32> to vector<4x32xf32>
    %212 = arith.addf %210, %211 : vector<4x32xf32>
    %213 = arith.negf %212 : vector<4x32xf32>
    %214 = math.exp %213 : vector<4x32xf32>
    %cst_45 = arith.constant 1.000000e+00 : f32
    %215 = vector.broadcast %cst_45 : f32 to vector<4x32xf32>
    %216 = arith.addf %215, %214 : vector<4x32xf32>
    %217 = arith.divf %215, %216 : vector<4x32xf32>
    %218 = vector.extract_strided_slice %201 {offsets = [0, 64], sizes = [4, 32], strides = [1, 1]} : vector<4x96xf32> to vector<4x32xf32>
    %219 = vector.extract_strided_slice %200 {offsets = [0, 64], sizes = [4, 32], strides = [1, 1]} : vector<4x96xf32> to vector<4x32xf32>
    %220 = arith.addf %219, %10 : vector<4x32xf32>
    %221 = arith.mulf %209, %220 : vector<4x32xf32>
    %222 = arith.addf %218, %221 : vector<4x32xf32>
    %223 = math.tanh %222 : vector<4x32xf32>
    %cst_46 = arith.constant 1.000000e+00 : f32
    %224 = vector.broadcast %cst_46 : f32 to vector<4x32xf32>
    %225 = arith.subf %224, %217 : vector<4x32xf32>
    %226 = arith.mulf %225, %223 : vector<4x32xf32>
    %227 = arith.mulf %217, %197 : vector<4x32xf32>
    %228 = arith.addf %226, %227 : vector<4x32xf32>
    %c24 = arith.constant 24 : index
    %c0_47 = arith.constant 0 : index
    %229 = vector.load %arg14[%c24, %c0_47] : memref<32x32xf32, #tpu.memory_space<vmem>>, vector<4x32xf32>
    tpu.vector_store %arg14[%c24, %c0_47], %228 {strides = array<i32>} : memref<32x32xf32, #tpu.memory_space<vmem>>, vector<4x32xf32>,
    %230 = arith.truncf %228 : vector<4x32xf32> to vector<4x32xbf16>
    %cst_48 = arith.constant dense<0.000000e+00> : vector<4x96xf32>
    %231 = tpu.matmul %230, %7, %cst_48 {dimension_numbers = #tpu.dot_dimension_numbers<[1], [0], [0], [1], [0, 0, 1, 1], [], []>} : vector<4x32xbf16>, vector<32x96xbf16>, vector<4x96xf32> -> vector<4x96xf32>
    %232 = vector.extract_strided_slice %6 {offsets = [28, 0], sizes = [4, 96], strides = [1, 1]} : vector<32x96xf32> to vector<4x96xf32>
    %233 = vector.extract_strided_slice %232 {offsets = [0, 0], sizes = [4, 32], strides = [1, 1]} : vector<4x96xf32> to vector<4x32xf32>
    %234 = vector.extract_strided_slice %231 {offsets = [0, 0], sizes = [4, 32], strides = [1, 1]} : vector<4x96xf32> to vector<4x32xf32>
    %235 = arith.addf %233, %234 : vector<4x32xf32>
    %236 = arith.negf %235 : vector<4x32xf32>
    %237 = math.exp %236 : vector<4x32xf32>
    %cst_49 = arith.constant 1.000000e+00 : f32
    %238 = vector.broadcast %cst_49 : f32 to vector<4x32xf32>
    %239 = arith.addf %238, %237 : vector<4x32xf32>
    %240 = arith.divf %238, %239 : vector<4x32xf32>
    %241 = vector.extract_strided_slice %232 {offsets = [0, 32], sizes = [4, 32], strides = [1, 1]} : vector<4x96xf32> to vector<4x32xf32>
    %242 = vector.extract_strided_slice %231 {offsets = [0, 32], sizes = [4, 32], strides = [1, 1]} : vector<4x96xf32> to vector<4x32xf32>
    %243 = arith.addf %241, %242 : vector<4x32xf32>
    %244 = arith.negf %243 : vector<4x32xf32>
    %245 = math.exp %244 : vector<4x32xf32>
    %cst_50 = arith.constant 1.000000e+00 : f32
    %246 = vector.broadcast %cst_50 : f32 to vector<4x32xf32>
    %247 = arith.addf %246, %245 : vector<4x32xf32>
    %248 = arith.divf %246, %247 : vector<4x32xf32>
    %249 = vector.extract_strided_slice %232 {offsets = [0, 64], sizes = [4, 32], strides = [1, 1]} : vector<4x96xf32> to vector<4x32xf32>
    %250 = vector.extract_strided_slice %231 {offsets = [0, 64], sizes = [4, 32], strides = [1, 1]} : vector<4x96xf32> to vector<4x32xf32>
    %251 = arith.addf %250, %10 : vector<4x32xf32>
    %252 = arith.mulf %240, %251 : vector<4x32xf32>
    %253 = arith.addf %249, %252 : vector<4x32xf32>
    %254 = math.tanh %253 : vector<4x32xf32>
    %cst_51 = arith.constant 1.000000e+00 : f32
    %255 = vector.broadcast %cst_51 : f32 to vector<4x32xf32>
    %256 = arith.subf %255, %248 : vector<4x32xf32>
    %257 = arith.mulf %256, %254 : vector<4x32xf32>
    %258 = arith.mulf %248, %228 : vector<4x32xf32>
    %259 = arith.addf %257, %258 : vector<4x32xf32>
    %c28 = arith.constant 28 : index
    %c0_52 = arith.constant 0 : index
    %260 = vector.load %arg14[%c28, %c0_52] : memref<32x32xf32, #tpu.memory_space<vmem>>, vector<4x32xf32>
    tpu.vector_store %arg14[%c28, %c0_52], %259 {strides = array<i32>} : memref<32x32xf32, #tpu.memory_space<vmem>>, vector<4x32xf32>,
    %c0_53 = arith.constant 0 : index
    %c0_54 = arith.constant 0 : index
    %c0_55 = arith.constant 0 : index
    %261 = vector.load %arg13[%c0_53, %c0_54, %c0_55] : memref<2x4x32xf32, #tpu.memory_space<vmem>>, vector<1x4x32xf32>
    %262 = vector.shape_cast %261 : vector<1x4x32xf32> to vector<4x32xf32>
    %263 = vector.shape_cast %259 : vector<4x32xf32> to vector<1x4x32xf32>
    tpu.vector_store %arg13[%c0_53, %c0_54, %c0_55], %263 {strides = array<i32>} : memref<2x4x32xf32, #tpu.memory_space<vmem>>, vector<1x4x32xf32>,
    %c0_56 = arith.constant 0 : index
    %c0_57 = arith.constant 0 : index
    %264 = vector.load %arg14[%c0_56, %c0_57] : memref<32x32xf32, #tpu.memory_space<vmem>>, vector<32x32xf32>
    %265 = arith.truncf %264 : vector<32x32xf32> to vector<32x32xbf16>
    %c0_58 = arith.constant 0 : index
    %c0_59 = arith.constant 0 : index
    %266 = vector.load %arg6[%c0_58, %c0_59] : memref<32x96xbf16, #tpu.memory_space<vmem>>, vector<32x96xbf16>
    %cst_60 = arith.constant dense<0.000000e+00> : vector<32x96xf32>
    %267 = tpu.matmul %265, %266, %cst_60 {dimension_numbers = #tpu.dot_dimension_numbers<[1], [0], [0], [1], [0, 0, 1, 1], [], []>} : vector<32x32xbf16>, vector<32x96xbf16>, vector<32x96xf32> -> vector<32x96xf32>
    %c0_61 = arith.constant 0 : index
    %c0_62 = arith.constant 0 : index
    %268 = vector.load %arg8[%c0_61, %c0_62] : memref<1x96xf32, #tpu.memory_space<vmem>>, vector<1x96xf32>
    %269 = vector.broadcast %268 : vector<1x96xf32> to vector<32x96xf32>
    %270 = arith.addf %267, %269 : vector<32x96xf32>
    %c0_63 = arith.constant 0 : index
    %c0_64 = arith.constant 0 : index
    %271 = vector.load %arg7[%c0_63, %c0_64] : memref<32x96xbf16, #tpu.memory_space<vmem>>, vector<32x96xbf16>
    %c0_65 = arith.constant 0 : index
    %c0_66 = arith.constant 0 : index
    %272 = vector.load %arg9[%c0_65, %c0_66] : memref<1x32xf32, #tpu.memory_space<vmem>>, vector<1x32xf32>
    %273 = vector.shape_cast %272 : vector<1x32xf32> to vector<1x32xf32>
    %274 = vector.broadcast %273 : vector<1x32xf32> to vector<4x32xf32>
    %c1 = arith.constant 1 : index
    %c0_67 = arith.constant 0 : index
    %c0_68 = arith.constant 0 : index
    %275 = vector.load %arg1[%c1, %c0_67, %c0_68] : memref<2x4x32xf32, #tpu.memory_space<vmem>>, vector<1x4x32xf32>
    %276 = vector.shape_cast %275 : vector<1x4x32xf32> to vector<4x32xf32>
    %277 = arith.truncf %276 : vector<4x32xf32> to vector<4x32xbf16>
    %cst_69 = arith.constant dense<0.000000e+00> : vector<4x96xf32>
    %278 = tpu.matmul %277, %271, %cst_69 {dimension_numbers = #tpu.dot_dimension_numbers<[1], [0], [0], [1], [0, 0, 1, 1], [], []>} : vector<4x32xbf16>, vector<32x96xbf16>, vector<4x96xf32> -> vector<4x96xf32>
    %279 = vector.extract_strided_slice %270 {offsets = [0, 0], sizes = [4, 96], strides = [1, 1]} : vector<32x96xf32> to vector<4x96xf32>
    %280 = vector.extract_strided_slice %279 {offsets = [0, 0], sizes = [4, 32], strides = [1, 1]} : vector<4x96xf32> to vector<4x32xf32>
    %281 = vector.extract_strided_slice %278 {offsets = [0, 0], sizes = [4, 32], strides = [1, 1]} : vector<4x96xf32> to vector<4x32xf32>
    %282 = arith.addf %280, %281 : vector<4x32xf32>
    %283 = arith.negf %282 : vector<4x32xf32>
    %284 = math.exp %283 : vector<4x32xf32>
    %cst_70 = arith.constant 1.000000e+00 : f32
    %285 = vector.broadcast %cst_70 : f32 to vector<4x32xf32>
    %286 = arith.addf %285, %284 : vector<4x32xf32>
    %287 = arith.divf %285, %286 : vector<4x32xf32>
    %288 = vector.extract_strided_slice %279 {offsets = [0, 32], sizes = [4, 32], strides = [1, 1]} : vector<4x96xf32> to vector<4x32xf32>
    %289 = vector.extract_strided_slice %278 {offsets = [0, 32], sizes = [4, 32], strides = [1, 1]} : vector<4x96xf32> to vector<4x32xf32>
    %290 = arith.addf %288, %289 : vector<4x32xf32>
    %291 = arith.negf %290 : vector<4x32xf32>
    %292 = math.exp %291 : vector<4x32xf32>
    %cst_71 = arith.constant 1.000000e+00 : f32
    %293 = vector.broadcast %cst_71 : f32 to vector<4x32xf32>
    %294 = arith.addf %293, %292 : vector<4x32xf32>
    %295 = arith.divf %293, %294 : vector<4x32xf32>
    %296 = vector.extract_strided_slice %279 {offsets = [0, 64], sizes = [4, 32], strides = [1, 1]} : vector<4x96xf32> to vector<4x32xf32>
    %297 = vector.extract_strided_slice %278 {offsets = [0, 64], sizes = [4, 32], strides = [1, 1]} : vector<4x96xf32> to vector<4x32xf32>
    %298 = arith.addf %297, %274 : vector<4x32xf32>
    %299 = arith.mulf %287, %298 : vector<4x32xf32>
    %300 = arith.addf %296, %299 : vector<4x32xf32>
    %301 = math.tanh %300 : vector<4x32xf32>
    %cst_72 = arith.constant 1.000000e+00 : f32
    %302 = vector.broadcast %cst_72 : f32 to vector<4x32xf32>
    %303 = arith.subf %302, %295 : vector<4x32xf32>
    %304 = arith.mulf %303, %301 : vector<4x32xf32>
    %305 = arith.mulf %295, %276 : vector<4x32xf32>
    %306 = arith.addf %304, %305 : vector<4x32xf32>
    %307 = vector.extract_strided_slice %306 {offsets = [3, 0], sizes = [1, 32], strides = [1, 1]} : vector<4x32xf32> to vector<1x32xf32>
    %308 = arith.truncf %306 : vector<4x32xf32> to vector<4x32xbf16>
    %cst_73 = arith.constant dense<0.000000e+00> : vector<4x96xf32>
    %309 = tpu.matmul %308, %271, %cst_73 {dimension_numbers = #tpu.dot_dimension_numbers<[1], [0], [0], [1], [0, 0, 1, 1], [], []>} : vector<4x32xbf16>, vector<32x96xbf16>, vector<4x96xf32> -> vector<4x96xf32>
    %310 = vector.extract_strided_slice %270 {offsets = [4, 0], sizes = [4, 96], strides = [1, 1]} : vector<32x96xf32> to vector<4x96xf32>
    %311 = vector.extract_strided_slice %310 {offsets = [0, 0], sizes = [4, 32], strides = [1, 1]} : vector<4x96xf32> to vector<4x32xf32>
    %312 = vector.extract_strided_slice %309 {offsets = [0, 0], sizes = [4, 32], strides = [1, 1]} : vector<4x96xf32> to vector<4x32xf32>
    %313 = arith.addf %311, %312 : vector<4x32xf32>
    %314 = arith.negf %313 : vector<4x32xf32>
    %315 = math.exp %314 : vector<4x32xf32>
    %cst_74 = arith.constant 1.000000e+00 : f32
    %316 = vector.broadcast %cst_74 : f32 to vector<4x32xf32>
    %317 = arith.addf %316, %315 : vector<4x32xf32>
    %318 = arith.divf %316, %317 : vector<4x32xf32>
    %319 = vector.extract_strided_slice %310 {offsets = [0, 32], sizes = [4, 32], strides = [1, 1]} : vector<4x96xf32> to vector<4x32xf32>
    %320 = vector.extract_strided_slice %309 {offsets = [0, 32], sizes = [4, 32], strides = [1, 1]} : vector<4x96xf32> to vector<4x32xf32>
    %321 = arith.addf %319, %320 : vector<4x32xf32>
    %322 = arith.negf %321 : vector<4x32xf32>
    %323 = math.exp %322 : vector<4x32xf32>
    %cst_75 = arith.constant 1.000000e+00 : f32
    %324 = vector.broadcast %cst_75 : f32 to vector<4x32xf32>
    %325 = arith.addf %324, %323 : vector<4x32xf32>
    %326 = arith.divf %324, %325 : vector<4x32xf32>
    %327 = vector.extract_strided_slice %310 {offsets = [0, 64], sizes = [4, 32], strides = [1, 1]} : vector<4x96xf32> to vector<4x32xf32>
    %328 = vector.extract_strided_slice %309 {offsets = [0, 64], sizes = [4, 32], strides = [1, 1]} : vector<4x96xf32> to vector<4x32xf32>
    %329 = arith.addf %328, %274 : vector<4x32xf32>
    %330 = arith.mulf %318, %329 : vector<4x32xf32>
    %331 = arith.addf %327, %330 : vector<4x32xf32>
    %332 = math.tanh %331 : vector<4x32xf32>
    %cst_76 = arith.constant 1.000000e+00 : f32
    %333 = vector.broadcast %cst_76 : f32 to vector<4x32xf32>
    %334 = arith.subf %333, %326 : vector<4x32xf32>
    %335 = arith.mulf %334, %332 : vector<4x32xf32>
    %336 = arith.mulf %326, %306 : vector<4x32xf32>
    %337 = arith.addf %335, %336 : vector<4x32xf32>
    %338 = vector.extract_strided_slice %337 {offsets = [3, 0], sizes = [1, 32], strides = [1, 1]} : vector<4x32xf32> to vector<1x32xf32>
    %339 = arith.truncf %337 : vector<4x32xf32> to vector<4x32xbf16>
    %cst_77 = arith.constant dense<0.000000e+00> : vector<4x96xf32>
    %340 = tpu.matmul %339, %271, %cst_77 {dimension_numbers = #tpu.dot_dimension_numbers<[1], [0], [0], [1], [0, 0, 1, 1], [], []>} : vector<4x32xbf16>, vector<32x96xbf16>, vector<4x96xf32> -> vector<4x96xf32>
    %341 = vector.extract_strided_slice %270 {offsets = [8, 0], sizes = [4, 96], strides = [1, 1]} : vector<32x96xf32> to vector<4x96xf32>
    %342 = vector.extract_strided_slice %341 {offsets = [0, 0], sizes = [4, 32], strides = [1, 1]} : vector<4x96xf32> to vector<4x32xf32>
    %343 = vector.extract_strided_slice %340 {offsets = [0, 0], sizes = [4, 32], strides = [1, 1]} : vector<4x96xf32> to vector<4x32xf32>
    %344 = arith.addf %342, %343 : vector<4x32xf32>
    %345 = arith.negf %344 : vector<4x32xf32>
    %346 = math.exp %345 : vector<4x32xf32>
    %cst_78 = arith.constant 1.000000e+00 : f32
    %347 = vector.broadcast %cst_78 : f32 to vector<4x32xf32>
    %348 = arith.addf %347, %346 : vector<4x32xf32>
    %349 = arith.divf %347, %348 : vector<4x32xf32>
    %350 = vector.extract_strided_slice %341 {offsets = [0, 32], sizes = [4, 32], strides = [1, 1]} : vector<4x96xf32> to vector<4x32xf32>
    %351 = vector.extract_strided_slice %340 {offsets = [0, 32], sizes = [4, 32], strides = [1, 1]} : vector<4x96xf32> to vector<4x32xf32>
    %352 = arith.addf %350, %351 : vector<4x32xf32>
    %353 = arith.negf %352 : vector<4x32xf32>
    %354 = math.exp %353 : vector<4x32xf32>
    %cst_79 = arith.constant 1.000000e+00 : f32
    %355 = vector.broadcast %cst_79 : f32 to vector<4x32xf32>
    %356 = arith.addf %355, %354 : vector<4x32xf32>
    %357 = arith.divf %355, %356 : vector<4x32xf32>
    %358 = vector.extract_strided_slice %341 {offsets = [0, 64], sizes = [4, 32], strides = [1, 1]} : vector<4x96xf32> to vector<4x32xf32>
    %359 = vector.extract_strided_slice %340 {offsets = [0, 64], sizes = [4, 32], strides = [1, 1]} : vector<4x96xf32> to vector<4x32xf32>
    %360 = arith.addf %359, %274 : vector<4x32xf32>
    %361 = arith.mulf %349, %360 : vector<4x32xf32>
    %362 = arith.addf %358, %361 : vector<4x32xf32>
    %363 = math.tanh %362 : vector<4x32xf32>
    %cst_80 = arith.constant 1.000000e+00 : f32
    %364 = vector.broadcast %cst_80 : f32 to vector<4x32xf32>
    %365 = arith.subf %364, %357 : vector<4x32xf32>
    %366 = arith.mulf %365, %363 : vector<4x32xf32>
    %367 = arith.mulf %357, %337 : vector<4x32xf32>
    %368 = arith.addf %366, %367 : vector<4x32xf32>
    %369 = vector.extract_strided_slice %368 {offsets = [3, 0], sizes = [1, 32], strides = [1, 1]} : vector<4x32xf32> to vector<1x32xf32>
    %370 = arith.truncf %368 : vector<4x32xf32> to vector<4x32xbf16>
    %cst_81 = arith.constant dense<0.000000e+00> : vector<4x96xf32>
    %371 = tpu.matmul %370, %271, %cst_81 {dimension_numbers = #tpu.dot_dimension_numbers<[1], [0], [0], [1], [0, 0, 1, 1], [], []>} : vector<4x32xbf16>, vector<32x96xbf16>, vector<4x96xf32> -> vector<4x96xf32>
    %372 = vector.extract_strided_slice %270 {offsets = [12, 0], sizes = [4, 96], strides = [1, 1]} : vector<32x96xf32> to vector<4x96xf32>
    %373 = vector.extract_strided_slice %372 {offsets = [0, 0], sizes = [4, 32], strides = [1, 1]} : vector<4x96xf32> to vector<4x32xf32>
    %374 = vector.extract_strided_slice %371 {offsets = [0, 0], sizes = [4, 32], strides = [1, 1]} : vector<4x96xf32> to vector<4x32xf32>
    %375 = arith.addf %373, %374 : vector<4x32xf32>
    %376 = arith.negf %375 : vector<4x32xf32>
    %377 = math.exp %376 : vector<4x32xf32>
    %cst_82 = arith.constant 1.000000e+00 : f32
    %378 = vector.broadcast %cst_82 : f32 to vector<4x32xf32>
    %379 = arith.addf %378, %377 : vector<4x32xf32>
    %380 = arith.divf %378, %379 : vector<4x32xf32>
    %381 = vector.extract_strided_slice %372 {offsets = [0, 32], sizes = [4, 32], strides = [1, 1]} : vector<4x96xf32> to vector<4x32xf32>
    %382 = vector.extract_strided_slice %371 {offsets = [0, 32], sizes = [4, 32], strides = [1, 1]} : vector<4x96xf32> to vector<4x32xf32>
    %383 = arith.addf %381, %382 : vector<4x32xf32>
    %384 = arith.negf %383 : vector<4x32xf32>
    %385 = math.exp %384 : vector<4x32xf32>
    %cst_83 = arith.constant 1.000000e+00 : f32
    %386 = vector.broadcast %cst_83 : f32 to vector<4x32xf32>
    %387 = arith.addf %386, %385 : vector<4x32xf32>
    %388 = arith.divf %386, %387 : vector<4x32xf32>
    %389 = vector.extract_strided_slice %372 {offsets = [0, 64], sizes = [4, 32], strides = [1, 1]} : vector<4x96xf32> to vector<4x32xf32>
    %390 = vector.extract_strided_slice %371 {offsets = [0, 64], sizes = [4, 32], strides = [1, 1]} : vector<4x96xf32> to vector<4x32xf32>
    %391 = arith.addf %390, %274 : vector<4x32xf32>
    %392 = arith.mulf %380, %391 : vector<4x32xf32>
    %393 = arith.addf %389, %392 : vector<4x32xf32>
    %394 = math.tanh %393 : vector<4x32xf32>
    %cst_84 = arith.constant 1.000000e+00 : f32
    %395 = vector.broadcast %cst_84 : f32 to vector<4x32xf32>
    %396 = arith.subf %395, %388 : vector<4x32xf32>
    %397 = arith.mulf %396, %394 : vector<4x32xf32>
    %398 = arith.mulf %388, %368 : vector<4x32xf32>
    %399 = arith.addf %397, %398 : vector<4x32xf32>
    %400 = vector.extract_strided_slice %399 {offsets = [3, 0], sizes = [1, 32], strides = [1, 1]} : vector<4x32xf32> to vector<1x32xf32>
    %401 = arith.truncf %399 : vector<4x32xf32> to vector<4x32xbf16>
    %cst_85 = arith.constant dense<0.000000e+00> : vector<4x96xf32>
    %402 = tpu.matmul %401, %271, %cst_85 {dimension_numbers = #tpu.dot_dimension_numbers<[1], [0], [0], [1], [0, 0, 1, 1], [], []>} : vector<4x32xbf16>, vector<32x96xbf16>, vector<4x96xf32> -> vector<4x96xf32>
    %403 = vector.extract_strided_slice %270 {offsets = [16, 0], sizes = [4, 96], strides = [1, 1]} : vector<32x96xf32> to vector<4x96xf32>
    %404 = vector.extract_strided_slice %403 {offsets = [0, 0], sizes = [4, 32], strides = [1, 1]} : vector<4x96xf32> to vector<4x32xf32>
    %405 = vector.extract_strided_slice %402 {offsets = [0, 0], sizes = [4, 32], strides = [1, 1]} : vector<4x96xf32> to vector<4x32xf32>
    %406 = arith.addf %404, %405 : vector<4x32xf32>
    %407 = arith.negf %406 : vector<4x32xf32>
    %408 = math.exp %407 : vector<4x32xf32>
    %cst_86 = arith.constant 1.000000e+00 : f32
    %409 = vector.broadcast %cst_86 : f32 to vector<4x32xf32>
    %410 = arith.addf %409, %408 : vector<4x32xf32>
    %411 = arith.divf %409, %410 : vector<4x32xf32>
    %412 = vector.extract_strided_slice %403 {offsets = [0, 32], sizes = [4, 32], strides = [1, 1]} : vector<4x96xf32> to vector<4x32xf32>
    %413 = vector.extract_strided_slice %402 {offsets = [0, 32], sizes = [4, 32], strides = [1, 1]} : vector<4x96xf32> to vector<4x32xf32>
    %414 = arith.addf %412, %413 : vector<4x32xf32>
    %415 = arith.negf %414 : vector<4x32xf32>
    %416 = math.exp %415 : vector<4x32xf32>
    %cst_87 = arith.constant 1.000000e+00 : f32
    %417 = vector.broadcast %cst_87 : f32 to vector<4x32xf32>
    %418 = arith.addf %417, %416 : vector<4x32xf32>
    %419 = arith.divf %417, %418 : vector<4x32xf32>
    %420 = vector.extract_strided_slice %403 {offsets = [0, 64], sizes = [4, 32], strides = [1, 1]} : vector<4x96xf32> to vector<4x32xf32>
    %421 = vector.extract_strided_slice %402 {offsets = [0, 64], sizes = [4, 32], strides = [1, 1]} : vector<4x96xf32> to vector<4x32xf32>
    %422 = arith.addf %421, %274 : vector<4x32xf32>
    %423 = arith.mulf %411, %422 : vector<4x32xf32>
    %424 = arith.addf %420, %423 : vector<4x32xf32>
    %425 = math.tanh %424 : vector<4x32xf32>
    %cst_88 = arith.constant 1.000000e+00 : f32
    %426 = vector.broadcast %cst_88 : f32 to vector<4x32xf32>
    %427 = arith.subf %426, %419 : vector<4x32xf32>
    %428 = arith.mulf %427, %425 : vector<4x32xf32>
    %429 = arith.mulf %419, %399 : vector<4x32xf32>
    %430 = arith.addf %428, %429 : vector<4x32xf32>
    %431 = vector.extract_strided_slice %430 {offsets = [3, 0], sizes = [1, 32], strides = [1, 1]} : vector<4x32xf32> to vector<1x32xf32>
    %432 = arith.truncf %430 : vector<4x32xf32> to vector<4x32xbf16>
    %cst_89 = arith.constant dense<0.000000e+00> : vector<4x96xf32>
    %433 = tpu.matmul %432, %271, %cst_89 {dimension_numbers = #tpu.dot_dimension_numbers<[1], [0], [0], [1], [0, 0, 1, 1], [], []>} : vector<4x32xbf16>, vector<32x96xbf16>, vector<4x96xf32> -> vector<4x96xf32>
    %434 = vector.extract_strided_slice %270 {offsets = [20, 0], sizes = [4, 96], strides = [1, 1]} : vector<32x96xf32> to vector<4x96xf32>
    %435 = vector.extract_strided_slice %434 {offsets = [0, 0], sizes = [4, 32], strides = [1, 1]} : vector<4x96xf32> to vector<4x32xf32>
    %436 = vector.extract_strided_slice %433 {offsets = [0, 0], sizes = [4, 32], strides = [1, 1]} : vector<4x96xf32> to vector<4x32xf32>
    %437 = arith.addf %435, %436 : vector<4x32xf32>
    %438 = arith.negf %437 : vector<4x32xf32>
    %439 = math.exp %438 : vector<4x32xf32>
    %cst_90 = arith.constant 1.000000e+00 : f32
    %440 = vector.broadcast %cst_90 : f32 to vector<4x32xf32>
    %441 = arith.addf %440, %439 : vector<4x32xf32>
    %442 = arith.divf %440, %441 : vector<4x32xf32>
    %443 = vector.extract_strided_slice %434 {offsets = [0, 32], sizes = [4, 32], strides = [1, 1]} : vector<4x96xf32> to vector<4x32xf32>
    %444 = vector.extract_strided_slice %433 {offsets = [0, 32], sizes = [4, 32], strides = [1, 1]} : vector<4x96xf32> to vector<4x32xf32>
    %445 = arith.addf %443, %444 : vector<4x32xf32>
    %446 = arith.negf %445 : vector<4x32xf32>
    %447 = math.exp %446 : vector<4x32xf32>
    %cst_91 = arith.constant 1.000000e+00 : f32
    %448 = vector.broadcast %cst_91 : f32 to vector<4x32xf32>
    %449 = arith.addf %448, %447 : vector<4x32xf32>
    %450 = arith.divf %448, %449 : vector<4x32xf32>
    %451 = vector.extract_strided_slice %434 {offsets = [0, 64], sizes = [4, 32], strides = [1, 1]} : vector<4x96xf32> to vector<4x32xf32>
    %452 = vector.extract_strided_slice %433 {offsets = [0, 64], sizes = [4, 32], strides = [1, 1]} : vector<4x96xf32> to vector<4x32xf32>
    %453 = arith.addf %452, %274 : vector<4x32xf32>
    %454 = arith.mulf %442, %453 : vector<4x32xf32>
    %455 = arith.addf %451, %454 : vector<4x32xf32>
    %456 = math.tanh %455 : vector<4x32xf32>
    %cst_92 = arith.constant 1.000000e+00 : f32
    %457 = vector.broadcast %cst_92 : f32 to vector<4x32xf32>
    %458 = arith.subf %457, %450 : vector<4x32xf32>
    %459 = arith.mulf %458, %456 : vector<4x32xf32>
    %460 = arith.mulf %450, %430 : vector<4x32xf32>
    %461 = arith.addf %459, %460 : vector<4x32xf32>
    %462 = vector.extract_strided_slice %461 {offsets = [3, 0], sizes = [1, 32], strides = [1, 1]} : vector<4x32xf32> to vector<1x32xf32>
    %463 = arith.truncf %461 : vector<4x32xf32> to vector<4x32xbf16>
    %cst_93 = arith.constant dense<0.000000e+00> : vector<4x96xf32>
    %464 = tpu.matmul %463, %271, %cst_93 {dimension_numbers = #tpu.dot_dimension_numbers<[1], [0], [0], [1], [0, 0, 1, 1], [], []>} : vector<4x32xbf16>, vector<32x96xbf16>, vector<4x96xf32> -> vector<4x96xf32>
    %465 = vector.extract_strided_slice %270 {offsets = [24, 0], sizes = [4, 96], strides = [1, 1]} : vector<32x96xf32> to vector<4x96xf32>
    %466 = vector.extract_strided_slice %465 {offsets = [0, 0], sizes = [4, 32], strides = [1, 1]} : vector<4x96xf32> to vector<4x32xf32>
    %467 = vector.extract_strided_slice %464 {offsets = [0, 0], sizes = [4, 32], strides = [1, 1]} : vector<4x96xf32> to vector<4x32xf32>
    %468 = arith.addf %466, %467 : vector<4x32xf32>
    %469 = arith.negf %468 : vector<4x32xf32>
    %470 = math.exp %469 : vector<4x32xf32>
    %cst_94 = arith.constant 1.000000e+00 : f32
    %471 = vector.broadcast %cst_94 : f32 to vector<4x32xf32>
    %472 = arith.addf %471, %470 : vector<4x32xf32>
    %473 = arith.divf %471, %472 : vector<4x32xf32>
    %474 = vector.extract_strided_slice %465 {offsets = [0, 32], sizes = [4, 32], strides = [1, 1]} : vector<4x96xf32> to vector<4x32xf32>
    %475 = vector.extract_strided_slice %464 {offsets = [0, 32], sizes = [4, 32], strides = [1, 1]} : vector<4x96xf32> to vector<4x32xf32>
    %476 = arith.addf %474, %475 : vector<4x32xf32>
    %477 = arith.negf %476 : vector<4x32xf32>
    %478 = math.exp %477 : vector<4x32xf32>
    %cst_95 = arith.constant 1.000000e+00 : f32
    %479 = vector.broadcast %cst_95 : f32 to vector<4x32xf32>
    %480 = arith.addf %479, %478 : vector<4x32xf32>
    %481 = arith.divf %479, %480 : vector<4x32xf32>
    %482 = vector.extract_strided_slice %465 {offsets = [0, 64], sizes = [4, 32], strides = [1, 1]} : vector<4x96xf32> to vector<4x32xf32>
    %483 = vector.extract_strided_slice %464 {offsets = [0, 64], sizes = [4, 32], strides = [1, 1]} : vector<4x96xf32> to vector<4x32xf32>
    %484 = arith.addf %483, %274 : vector<4x32xf32>
    %485 = arith.mulf %473, %484 : vector<4x32xf32>
    %486 = arith.addf %482, %485 : vector<4x32xf32>
    %487 = math.tanh %486 : vector<4x32xf32>
    %cst_96 = arith.constant 1.000000e+00 : f32
    %488 = vector.broadcast %cst_96 : f32 to vector<4x32xf32>
    %489 = arith.subf %488, %481 : vector<4x32xf32>
    %490 = arith.mulf %489, %487 : vector<4x32xf32>
    %491 = arith.mulf %481, %461 : vector<4x32xf32>
    %492 = arith.addf %490, %491 : vector<4x32xf32>
    %493 = vector.extract_strided_slice %492 {offsets = [3, 0], sizes = [1, 32], strides = [1, 1]} : vector<4x32xf32> to vector<1x32xf32>
    %494 = arith.truncf %492 : vector<4x32xf32> to vector<4x32xbf16>
    %cst_97 = arith.constant dense<0.000000e+00> : vector<4x96xf32>
    %495 = tpu.matmul %494, %271, %cst_97 {dimension_numbers = #tpu.dot_dimension_numbers<[1], [0], [0], [1], [0, 0, 1, 1], [], []>} : vector<4x32xbf16>, vector<32x96xbf16>, vector<4x96xf32> -> vector<4x96xf32>
    %496 = vector.extract_strided_slice %270 {offsets = [28, 0], sizes = [4, 96], strides = [1, 1]} : vector<32x96xf32> to vector<4x96xf32>
    %497 = vector.extract_strided_slice %496 {offsets = [0, 0], sizes = [4, 32], strides = [1, 1]} : vector<4x96xf32> to vector<4x32xf32>
    %498 = vector.extract_strided_slice %495 {offsets = [0, 0], sizes = [4, 32], strides = [1, 1]} : vector<4x96xf32> to vector<4x32xf32>
    %499 = arith.addf %497, %498 : vector<4x32xf32>
    %500 = arith.negf %499 : vector<4x32xf32>
    %501 = math.exp %500 : vector<4x32xf32>
    %cst_98 = arith.constant 1.000000e+00 : f32
    %502 = vector.broadcast %cst_98 : f32 to vector<4x32xf32>
    %503 = arith.addf %502, %501 : vector<4x32xf32>
    %504 = arith.divf %502, %503 : vector<4x32xf32>
    %505 = vector.extract_strided_slice %496 {offsets = [0, 32], sizes = [4, 32], strides = [1, 1]} : vector<4x96xf32> to vector<4x32xf32>
    %506 = vector.extract_strided_slice %495 {offsets = [0, 32], sizes = [4, 32], strides = [1, 1]} : vector<4x96xf32> to vector<4x32xf32>
    %507 = arith.addf %505, %506 : vector<4x32xf32>
    %508 = arith.negf %507 : vector<4x32xf32>
    %509 = math.exp %508 : vector<4x32xf32>
    %cst_99 = arith.constant 1.000000e+00 : f32
    %510 = vector.broadcast %cst_99 : f32 to vector<4x32xf32>
    %511 = arith.addf %510, %509 : vector<4x32xf32>
    %512 = arith.divf %510, %511 : vector<4x32xf32>
    %513 = vector.extract_strided_slice %496 {offsets = [0, 64], sizes = [4, 32], strides = [1, 1]} : vector<4x96xf32> to vector<4x32xf32>
    %514 = vector.extract_strided_slice %495 {offsets = [0, 64], sizes = [4, 32], strides = [1, 1]} : vector<4x96xf32> to vector<4x32xf32>
    %515 = arith.addf %514, %274 : vector<4x32xf32>
    %516 = arith.mulf %504, %515 : vector<4x32xf32>
    %517 = arith.addf %513, %516 : vector<4x32xf32>
    %518 = math.tanh %517 : vector<4x32xf32>
    %cst_100 = arith.constant 1.000000e+00 : f32
    %519 = vector.broadcast %cst_100 : f32 to vector<4x32xf32>
    %520 = arith.subf %519, %512 : vector<4x32xf32>
    %521 = arith.mulf %520, %518 : vector<4x32xf32>
    %522 = arith.mulf %512, %492 : vector<4x32xf32>
    %523 = arith.addf %521, %522 : vector<4x32xf32>
    %524 = vector.extract_strided_slice %523 {offsets = [3, 0], sizes = [1, 32], strides = [1, 1]} : vector<4x32xf32> to vector<1x32xf32>
    %c1_101 = arith.constant 1 : index
    %c0_102 = arith.constant 0 : index
    %c0_103 = arith.constant 0 : index
    %525 = vector.load %arg13[%c1_101, %c0_102, %c0_103] : memref<2x4x32xf32, #tpu.memory_space<vmem>>, vector<1x4x32xf32>
    %526 = vector.shape_cast %525 : vector<1x4x32xf32> to vector<4x32xf32>
    %527 = vector.shape_cast %523 : vector<4x32xf32> to vector<1x4x32xf32>
    tpu.vector_store %arg13[%c1_101, %c0_102, %c0_103], %527 {strides = array<i32>} : memref<2x4x32xf32, #tpu.memory_space<vmem>>, vector<1x4x32xf32>,
    %528 = tpu.concatenate %307, %338, %369, %400, %431, %462, %493, %524 in 0 : vector<1x32xf32>, vector<1x32xf32>, vector<1x32xf32>, vector<1x32xf32>, vector<1x32xf32>, vector<1x32xf32>, vector<1x32xf32>, vector<1x32xf32> -> vector<8x32xf32>
    %529 = arith.truncf %528 : vector<8x32xf32> to vector<8x32xbf16>
    %c0_104 = arith.constant 0 : index
    %c0_105 = arith.constant 0 : index
    %530 = vector.load %arg10[%c0_104, %c0_105] : memref<32x10xbf16, #tpu.memory_space<vmem>>, vector<32x10xbf16>
    %cst_106 = arith.constant dense<0.000000e+00> : vector<8x10xf32>
    %531 = tpu.matmul %529, %530, %cst_106 {dimension_numbers = #tpu.dot_dimension_numbers<[1], [0], [0], [1], [0, 0, 1, 1], [], []>} : vector<8x32xbf16>, vector<32x10xbf16>, vector<8x10xf32> -> vector<8x10xf32>
    %c0_107 = arith.constant 0 : index
    %c0_108 = arith.constant 0 : index
    %532 = vector.load %arg11[%c0_107, %c0_108] : memref<1x10xf32, #tpu.memory_space<vmem>>, vector<1x10xf32>
    %533 = vector.broadcast %532 : vector<1x10xf32> to vector<8x10xf32>
    %534 = arith.addf %531, %533 : vector<8x10xf32>
    %cst_109 = arith.constant dense<0xFF800000> : vector<8xf32>
    %535 = vector.multi_reduction <maximumf>, %534, %cst_109 [1] : vector<8x10xf32> to vector<8xf32>
    %536 = vector.shape_cast %535 : vector<8xf32> to vector<8x1xf32>
    %537 = vector.broadcast %536 : vector<8x1xf32> to vector<8x10xf32>
    %538 = arith.subf %534, %537 : vector<8x10xf32>
    %539 = math.exp %538 : vector<8x10xf32>
    %cst_110 = arith.constant dense<0.000000e+00> : vector<8xf32>
    %540 = vector.multi_reduction <add>, %539, %cst_110 [1] : vector<8x10xf32> to vector<8xf32>
    %541 = vector.shape_cast %540 : vector<8xf32> to vector<8x1xf32>
    %542 = math.log %541 : vector<8x1xf32>
    %543 = arith.addf %542, %536 : vector<8x1xf32>
    %544 = vector.broadcast %543 : vector<8x1xf32> to vector<8x10xf32>
    %545 = arith.subf %534, %544 : vector<8x10xf32>
    %c0_111 = arith.constant 0 : index
    %c0_112 = arith.constant 0 : index
    %546 = vector.load %arg12[%c0_111, %c0_112] : memref<8x10xf32, #tpu.memory_space<vmem>>, vector<8x10xf32>
    tpu.vector_store %arg12[%c0_111, %c0_112], %545 {strides = array<i32>} : memref<8x10xf32, #tpu.memory_space<vmem>>, vector<8x10xf32>,
    return
  }
}

</mosaic_0001>

<llo_original>
// kernel: tpu_custom_call.1
$region0: #{tpu_custom_call.1}
  #allocation0 [shape = 'u32[]', space=smem, size = 0x4, offset = 0x4, fixed_abs, tag = 'smem constant byte address 0x4 - core index']
  #allocation1 [shape = 'u32[72,128]{1,0:T(1,128)}', space=vmem, size = 0x9000, scoped, tag = 'internal scratch']
  #allocation2 [shape = 'f32[32,32]{1,0:T(8,128)}', space=vmem, size = 0x4000, scoped, tag = 'scratch operand']
  %s0 = inlined_call_operand.vmem [shape: f32[32,16], index: 0, kind: input, shape index: {}]
  %s1 = inlined_call_operand.vmem [shape: f32[2,4,32], index: 1, kind: input, shape index: {}]
  %s2 = inlined_call_operand.hbm [shape: bf16[16,96], index: 2, kind: input, shape index: {}]
  %s3 = inlined_call_operand.vmem [shape: bf16[32,96], index: 3, kind: input, shape index: {}]
  %s4 = inlined_call_operand.vmem [shape: f32[1,96], index: 4, kind: input, shape index: {}]
  %s5 = inlined_call_operand.hbm [shape: f32[1,32], index: 5, kind: input, shape index: {}]
  %s6 = inlined_call_operand.vmem [shape: bf16[32,96], index: 6, kind: input, shape index: {}]
  %s7 = inlined_call_operand.vmem [shape: bf16[32,96], index: 7, kind: input, shape index: {}]
  %s8 = inlined_call_operand.hbm [shape: f32[1,96], index: 8, kind: input, shape index: {}]
  %s9 = inlined_call_operand.hbm [shape: f32[1,32], index: 9, kind: input, shape index: {}]
  %s10 = inlined_call_operand.vmem [shape: bf16[32,10], index: 10, kind: input, shape index: {}]
  %s11 = inlined_call_operand.vmem [shape: f32[1,10], index: 11, kind: input, shape index: {}]
  %s12 = inlined_call_operand.hbm [shape: f32[8,10], index: 12, kind: output, shape index: {0}]
  %s13 = inlined_call_operand.hbm [shape: f32[2,4,32], index: 13, kind: output, shape index: {1}]
  %14 = xla_tuple %s12, %s13
  %s15 = sld [smem:[#allocation0]]
  $region82: #{tpu_custom_call.1} parent=0
    _
  %s17 = ssub.s32 1, %s15
  %s18 = scalar_select 0, %s17, %s15
  $region1: #{tpu_custom_call.1} parent=0
    #allocation3 [shape = 'u8[4096]{0}', space=vmem, size = 0x1000, scoped, tag = 'input window, operand 2, single buffered']
    #allocation4 [shape = 's32[1]{0}', space=sflag, size = 0x4, scoped, tag = 'scoped memory for tpu_custom_call.1']
    #allocation5 [shape = 's32[1]{0}', space=sflag, size = 0x4, scoped, tag = 'scoped memory for tpu_custom_call.1']
    #allocation6 [shape = 'u8[512]{0}', space=vmem, size = 0x400, scoped, tag = 'input window, operand 5, single buffered']
    #allocation7 [shape = 's32[1]{0}', space=sflag, size = 0x4, scoped, tag = 'scoped memory for tpu_custom_call.1']
    #allocation8 [shape = 'u8[512]{0}', space=vmem, size = 0x400, scoped, tag = 'input window, operand 8, single buffered']
    #allocation9 [shape = 'u8[512]{0}', space=vmem, size = 0x400, scoped, tag = 'input window, operand 9, single buffered']
    #allocation10 [shape = 's32[1]{0}', space=sflag, size = 0x4, scoped, tag = 'scoped memory for tpu_custom_call.1']
    #allocation11 [shape = 'u8[4096]{0}', space=vmem, size = 0x1000, scoped, tag = 'output window, operand 0, single buffered']
    #allocation12 [shape = 'u8[4096]{0}', space=vmem, size = 0x1000, scoped, tag = 'output window, operand 1, single buffered']
    #allocation13 [shape = 's32[1]{0}', space=sflag, size = 0x4, scoped, tag = 'scoped memory for tpu_custom_call.1']
    %19 = vsyncpa [#allocation4], 0
    %20 = vsyncpa [#allocation7], 0
    %21 = vsyncpa [#allocation10], 0
    %22 = vsyncpa [#allocation5], 0
    %23 = vsyncpa [#allocation13], 0
    // Predicated region
    $region2: #{tpu_custom_call.1} parent=1 // pred_check
      _
    $region3: #{tpu_custom_call.1} parent=1 // pred_check_branch
      %25 = sbr.rel (0) target = $region5
    $region4: #{tpu_custom_call.1} parent=1 // pred_region
      _
    $region5: #{tpu_custom_call.1} parent=1 // pred_fallthru
      _
    // Predicated region
    $region6: #{tpu_custom_call.1} parent=1 // pred_check
      _
    $region7: #{tpu_custom_call.1} parent=1 // pred_check_branch
      %27 = sbr.rel (0) target = $region9
    $region8: #{tpu_custom_call.1} parent=1 // pred_region
      _
    $region9: #{tpu_custom_call.1} parent=1 // pred_fallthru
      _
    // Predicated region
    $region10: #{tpu_custom_call.1} parent=1 // pred_check
      _
    $region11: #{tpu_custom_call.1} parent=1 // pred_check_branch
      %29 = sbr.rel (0) target = $region13
    $region12: #{tpu_custom_call.1} parent=1 // pred_region
      %31 = vsyncadd [#allocation4], 0
      %s32 = sshll.u32 %s2, 4
      %s33 = int_to_ptr.hbm [resolvable:$true] %s32
      %s34 = sshll.u32 [#allocation3], 4
      %s35 = int_to_ptr.vmem [resolvable:$true] %s34
      %40 = dma.hbm_to_vmem [thread:$0]  %s33, 128, %s35, [#allocation4], 64, 64, 4
    $region13: #{tpu_custom_call.1} parent=1 // pred_fallthru
      _
    // Predicated region
    $region14: #{tpu_custom_call.1} parent=1 // pred_check
      _
    $region15: #{tpu_custom_call.1} parent=1 // pred_check_branch
      %42 = sbr.rel (0) target = $region17
    $region16: #{tpu_custom_call.1} parent=1 // pred_region
      _
    $region17: #{tpu_custom_call.1} parent=1 // pred_fallthru
      _
    // Predicated region
    $region18: #{tpu_custom_call.1} parent=1 // pred_check
      _
    $region19: #{tpu_custom_call.1} parent=1 // pred_check_branch
      %44 = sbr.rel (0) target = $region21
    $region20: #{tpu_custom_call.1} parent=1 // pred_region
      _
    $region21: #{tpu_custom_call.1} parent=1 // pred_fallthru
      _
    // Predicated region
    $region22: #{tpu_custom_call.1} parent=1 // pred_check
      _
    $region23: #{tpu_custom_call.1} parent=1 // pred_check_branch
      %46 = sbr.rel (0) target = $region25
    $region24: #{tpu_custom_call.1} parent=1 // pred_region
      %48 = vsyncadd [#allocation7], 0
      %s50 = sshll.u32 %s5, 4
      %s51 = int_to_ptr.hbm [resolvable:$true] %s50
      %s52 = sshll.u32 [#allocation6], 4
      %s53 = int_to_ptr.vmem [resolvable:$true] %s52
      %55 = dma.hbm_to_vmem [thread:$0]  %s51, 16, %s53, [#allocation7]
    $region25: #{tpu_custom_call.1} parent=1 // pred_fallthru
      _
    // Predicated region
    $region26: #{tpu_custom_call.1} parent=1 // pred_check
      _
    $region27: #{tpu_custom_call.1} parent=1 // pred_check_branch
      %57 = sbr.rel (0) target = $region29
    $region28: #{tpu_custom_call.1} parent=1 // pred_region
      _
    $region29: #{tpu_custom_call.1} parent=1 // pred_fallthru
      _
    // Predicated region
    $region30: #{tpu_custom_call.1} parent=1 // pred_check
      _
    $region31: #{tpu_custom_call.1} parent=1 // pred_check_branch
      %59 = sbr.rel (0) target = $region33
    $region32: #{tpu_custom_call.1} parent=1 // pred_region
      _
    $region33: #{tpu_custom_call.1} parent=1 // pred_fallthru
      _
    // Predicated region
    $region34: #{tpu_custom_call.1} parent=1 // pred_check
      _
    $region35: #{tpu_custom_call.1} parent=1 // pred_check_branch
      %61 = sbr.rel (0) target = $region37
    $region36: #{tpu_custom_call.1} parent=1 // pred_region
      %63 = vsyncadd [#allocation7], 0
      %s65 = sshll.u32 %s8, 4
      %s66 = int_to_ptr.hbm [resolvable:$true] %s65
      %s67 = sshll.u32 [#allocation8], 4
      %s68 = int_to_ptr.vmem [resolvable:$true] %s67
      %70 = dma.hbm_to_vmem [thread:$0]  %s66, 16, %s68, [#allocation7]
    $region37: #{tpu_custom_call.1} parent=1 // pred_fallthru
      _
    // Predicated region
    $region38: #{tpu_custom_call.1} parent=1 // pred_check
      _
    $region39: #{tpu_custom_call.1} parent=1 // pred_check_branch
      %72 = sbr.rel (0) target = $region41
    $region40: #{tpu_custom_call.1} parent=1 // pred_region
      %74 = vsyncadd [#allocation10], 0
      %s76 = sshll.u32 %s9, 4
      %s77 = int_to_ptr.hbm [resolvable:$true] %s76
      %s78 = sshll.u32 [#allocation9], 4
      %s79 = int_to_ptr.vmem [resolvable:$true] %s78
      %81 = dma.hbm_to_vmem [thread:$0]  %s77, 16, %s79, [#allocation10]
    $region41: #{tpu_custom_call.1} parent=1 // pred_fallthru
      _
    // Predicated region
    $region42: #{tpu_custom_call.1} parent=1 // pred_check
      _
    $region43: #{tpu_custom_call.1} parent=1 // pred_check_branch
      %83 = sbr.rel (0) target = $region45
    $region44: #{tpu_custom_call.1} parent=1 // pred_region
      _
    $region45: #{tpu_custom_call.1} parent=1 // pred_fallthru
      _
    // Predicated region
    $region46: #{tpu_custom_call.1} parent=1 // pred_check
      _
    $region47: #{tpu_custom_call.1} parent=1 // pred_check_branch
      %85 = sbr.rel (0) target = $region49
    $region48: #{tpu_custom_call.1} parent=1 // pred_region
      _
    $region49: #{tpu_custom_call.1} parent=1 // pred_fallthru
      _
    // Predicated region
    $region50: #{tpu_custom_call.1} parent=1 // pred_check
      _
    $region51: #{tpu_custom_call.1} parent=1 // pred_check_branch
      %87 = sbr.rel (0) target = $region53
    $region52: #{tpu_custom_call.1} parent=1 // pred_region
      %89 = dma.done [#allocation4], 128
    $region53: #{tpu_custom_call.1} parent=1 // pred_fallthru
      _
    // Predicated region
    $region54: #{tpu_custom_call.1} parent=1 // pred_check
      _
    $region55: #{tpu_custom_call.1} parent=1 // pred_check_branch
      %91 = sbr.rel (0) target = $region57
    $region56: #{tpu_custom_call.1} parent=1 // pred_region
      %93 = dma.done [#allocation7], 16
    $region57: #{tpu_custom_call.1} parent=1 // pred_fallthru
      _
    // Predicated region
    $region58: #{tpu_custom_call.1} parent=1 // pred_check
      _
    $region59: #{tpu_custom_call.1} parent=1 // pred_check_branch
      %95 = sbr.rel (0) target = $region61
    $region60: #{tpu_custom_call.1} parent=1 // pred_region
      %97 = dma.done [#allocation7], 16
    $region61: #{tpu_custom_call.1} parent=1 // pred_fallthru
      _
    // Predicated region
    $region62: #{tpu_custom_call.1} parent=1 // pred_check
      _
    $region63: #{tpu_custom_call.1} parent=1 // pred_check_branch
      %99 = sbr.rel (0) target = $region65
    $region64: #{tpu_custom_call.1} parent=1 // pred_region
      %101 = dma.done [#allocation10], 16
    $region65: #{tpu_custom_call.1} parent=1 // pred_fallthru
      _
    %v103 = vld [vmem:[%s0] sm:$0xff]
    %v104 = vld [vmem:[%s0 + $0x8] sm:$0xff]
    %v105 = vld [vmem:[%s0 + $0x10] sm:$0xff]
    %v106 = vld [vmem:[%s0 + $0x18] sm:$0xff]
    %v107 = vpack.c.bf16 %v104, %v103
    %v108 = vpack.c.bf16 %v106, %v105
    %v109 = vld [vmem:[#allocation3] sm:$0xf]
    %v110 = vld [vmem:[#allocation3 + $0x4] sm:$0xf]
    %v111 = vld [vmem:[%s4] sm:$0x1]
    %v113 = vperm.slane %v111, 0
    %v117 = vunpack.c.l.b16 %v109
    %v118 = vunpack.c.l.b16 %v110
    %v119 = vpack.c.b16 %v118, %v117
    %vm121 = vcmask 130048
    %v123 = vsel %vm121, %v107, 0
    %v126 = vsel %vm121, %v108, 0
    %128 = vmatpush.bf16.msra.mxu0 0
    %129 = vmatpush.bf16.msra.mxu0 0
    %130 = vmatpush.bf16.msra.mxu0 0
    %131 = vmatpush.bf16.msra.mxu0 0
    %132 = vmatpush.bf16.msra.mxu0 0
    %133 = vmatpush.bf16.msra.mxu0 0
    %134 = vmatpush.bf16.msra.mxu0 0
    %135 = vmatpush.bf16.msra.mxu0 %v119
    %136 = vmatmul.bf16.gmra.mxu0 %v123
    %v137 = vpop.f32.mrf.mxu0
    %v138 = vadd.f32 %v113, %v137
    %v139 = vpop.f32.mrf.mxu0
    %v140 = vadd.f32 %v113, %v139
    %141 = vmatmul.bf16.gmra.mxu0 %v126
    %v142 = vpop.f32.mrf.mxu0
    %v143 = vadd.f32 %v113, %v142
    %v144 = vpop.f32.mrf.mxu0
    %v145 = vadd.f32 %v113, %v144
    %146 = vdwg.mxu0
    %v147 = vld [vmem:[%s3] sm:$0xf]
    %v148 = vld [vmem:[%s3 + $0x4] sm:$0xf]
    %v149 = vld [vmem:[%s3 + $0x8] sm:$0xf]
    %v150 = vld [vmem:[%s3 + $0xc] sm:$0xf]
    %v151 = vld [vmem:[#allocation6] sm:$0x1]
    %v153 = vperm.slane %v151, 0
    %v154 = vld [vmem:[%s1] sm:$0xf]
    %v155 = vpack.c.bf16 %v154, %v154
    %v160 = vunpack.c.l.b16 %v147
    %v161 = vunpack.c.l.b16 %v148
    %v162 = vunpack.c.l.b16 %v149
    %v163 = vunpack.c.l.b16 %v150
    %v164 = vpack.c.b16 %v161, %v160
    %v165 = vpack.c.b16 %v163, %v162
    %vm168 = vcmask 261120
    %v170 = vsel %vm168, %v155, 0
    %172 = vmatpush.bf16.msra.mxu0 0
    %173 = vmatpush.bf16.msra.mxu0 0
    %174 = vmatpush.bf16.msra.mxu0 0
    %175 = vmatpush.bf16.msra.mxu0 0
    %176 = vmatpush.bf16.msra.mxu0 0
    %177 = vmatpush.bf16.msra.mxu0 0
    %178 = vmatpush.bf16.msra.mxu0 %v165
    %179 = vmatpush.bf16.msra.mxu0 %v164
    %180 = vmatmul.bf16.gmra.mxu0 %v170
    %v181 = vpop.f32.mrf.mxu0
    %v182 = vadd.f32 0.0, %v181
    %v183 = vpop.f32.mrf.mxu0
    %184 = vdwg.mxu0
    %v185 = vadd.f32 %v138, %v182
    %v186 = vxor.u32 %v185, 2147483648
    %v187 = vmul.f32 %v186, 1.442695
    %v188 = vpow.pop %v187
    %v189 = vadd.f32 %v188, 1.0
    %v190 = vrcp.pop %v189
    %v191 = vmul.f32 %v189, %v190
    %v192 = vsub.f32 1.0, %v191
    %v193 = vmul.f32 %v190, %v192
    %v194 = vadd.f32 %v190, %v193
    %vm195 = vweird.f32 %v189
    %vm196 = vweird.f32 %v190
    %vm197 = vmor %vm195, %vm196
    %v198 = vsel %vm197, %v190, %v194
    %v199 = vand.u32 2147483647, %v189
    %vm200 = vcmp.eq.f32.partialorder %v199, 8.507059e+37
    %v201 = vand.u32 %v189, 2147483648
    %v202 = vor.u32 1.1754944e-38, %v201
    %v203 = vsel %vm200, %v202, %v198
    %v204 = vmul.f32 1.0, %v203
    %205 = vrot.lane.b32.xlu0 %v153, 64
    %v206 = vpop.permute.xlu0 %205
    %v208 = vadd.f32 %v182, %v206
    %210 = vrot.lane.b32.xlu0 %v208, 64
    %v211 = vpop.permute.xlu0 %210
    %v213 = vmul.f32 %v204, %v211
    %215 = vrot.lane.b32.xlu0 %v213, 64
    %v216 = vpop.permute.xlu0 %215
    %v218 = vadd.f32 %v138, %v216
    %v219 = vtanh.pop %v218
    %v220 = vsub.f32 1.0, %v204
    %222 = vrot.lane.b32.xlu0 %v219, 96
    %v223 = vpop.permute.xlu0 %222
    %v225 = vmul.f32 %v220, %v223
    %227 = vrot.lane.b32.xlu0 %v154, 32
    %v228 = vpop.permute.xlu0 %227
    %v230 = vmul.f32 %v204, %v228
    %v231 = vadd.f32 %v225, %v230
    %233 = vrot.lane.b32.xlu0 %v231, 96
    %v234 = vpop.permute.xlu0 %233
    %vm236 = vcmask 257024
    %237 = vst.msk [vmem:[#allocation2] sm:$0xf] %vm236, %v234
    %v238 = vpack.c.bf16 %v231, %v231
    %240 = vrot.lane.b32.xlu0 %v238, 96
    %v241 = vpop.permute.xlu0 %240
    %v243 = vsel %vm168, %v241, 0
    %245 = vmatpush.bf16.msra.mxu0 0
    %246 = vmatpush.bf16.msra.mxu0 0
    %247 = vmatpush.bf16.msra.mxu0 0
    %248 = vmatpush.bf16.msra.mxu0 0
    %249 = vmatpush.bf16.msra.mxu0 0
    %250 = vmatpush.bf16.msra.mxu0 0
    %251 = vmatpush.bf16.msra.mxu0 %v165
    %252 = vmatpush.bf16.msra.mxu0 %v164
    %253 = vmatmul.bf16.gmra.mxu0 %v243
    %v254 = vpop.f32.mrf.mxu0
    %v255 = vadd.f32 0.0, %v254
    %v256 = vpop.f32.mrf.mxu0
    %257 = vdwg.mxu0
    %v259 = vrot.slane %v255, 4
    %v261 = vadd.f32 %v138, %v259
    %v262 = vxor.u32 %v261, 2147483648
    %v263 = vmul.f32 %v262, 1.442695
    %v264 = vpow.pop %v263
    %v265 = vadd.f32 %v264, 1.0
    %v266 = vrcp.pop %v265
    %v267 = vmul.f32 %v265, %v266
    %v268 = vsub.f32 1.0, %v267
    %v269 = vmul.f32 %v266, %v268
    %v270 = vadd.f32 %v266, %v269
    %vm271 = vweird.f32 %v265
    %vm272 = vweird.f32 %v266
    %vm273 = vmor %vm271, %vm272
    %v274 = vsel %vm273, %v266, %v270
    %v275 = vand.u32 2147483647, %v265
    %vm276 = vcmp.eq.f32.partialorder %v275, 8.507059e+37
    %v277 = vand.u32 %v265, 2147483648
    %v278 = vor.u32 1.1754944e-38, %v277
    %v279 = vsel %vm276, %v278, %v274
    %v280 = vmul.f32 1.0, %v279
    %v281 = vadd.f32 %v255, %v206
    %v283 = vrot.slane %v281, 4
    %284 = vrot.lane.b32.xlu0 %v283, 64
    %v285 = vpop.permute.xlu0 %284
    %v287 = vmul.f32 %v280, %v285
    %289 = vrot.lane.b32.xlu0 %v287, 64
    %v290 = vpop.permute.xlu0 %289
    %v292 = vadd.f32 %v138, %v290
    %v293 = vtanh.pop %v292
    %v294 = vsub.f32 1.0, %v280
    %296 = vrot.lane.b32.xlu0 %v293, 96
    %v297 = vpop.permute.xlu0 %296
    %v299 = vmul.f32 %v294, %v297
    %v300 = vrot.slane %v231, 4
    %v302 = vmul.f32 %v280, %v300
    %v303 = vadd.f32 %v299, %v302
    %305 = vrot.lane.b32.xlu0 %v303, 96
    %v306 = vpop.permute.xlu0 %305
    %vm308 = vcmask 261124
    %309 = vst.msk [vmem:[#allocation2] sm:$0xf0] %vm308, %v306
    %v310 = vpack.c.bf16 %v303, %v303
    %v312 = vrot.slane %v310, 2
    %313 = vrot.lane.b32.xlu0 %v312, 96
    %v314 = vpop.permute.xlu0 %313
    %v316 = vsel %vm168, %v314, 0
    %318 = vmatpush.bf16.msra.mxu0 0
    %319 = vmatpush.bf16.msra.mxu0 0
    %320 = vmatpush.bf16.msra.mxu0 0
    %321 = vmatpush.bf16.msra.mxu0 0
    %322 = vmatpush.bf16.msra.mxu0 0
    %323 = vmatpush.bf16.msra.mxu0 0
    %324 = vmatpush.bf16.msra.mxu0 %v165
    %325 = vmatpush.bf16.msra.mxu0 %v164
    %326 = vmatmul.bf16.gmra.mxu0 %v316
    %v327 = vpop.f32.mrf.mxu0
    %v328 = vadd.f32 0.0, %v327
    %v329 = vpop.f32.mrf.mxu0
    %330 = vdwg.mxu0
    %v331 = vadd.f32 %v140, %v328
    %v332 = vxor.u32 %v331, 2147483648
    %v333 = vmul.f32 %v332, 1.442695
    %v334 = vpow.pop %v333
    %v335 = vadd.f32 %v334, 1.0
    %v336 = vrcp.pop %v335
    %v337 = vmul.f32 %v335, %v336
    %v338 = vsub.f32 1.0, %v337
    %v339 = vmul.f32 %v336, %v338
    %v340 = vadd.f32 %v336, %v339
    %vm341 = vweird.f32 %v335
    %vm342 = vweird.f32 %v336
    %vm343 = vmor %vm341, %vm342
    %v344 = vsel %vm343, %v336, %v340
    %v345 = vand.u32 2147483647, %v335
    %vm346 = vcmp.eq.f32.partialorder %v345, 8.507059e+37
    %v347 = vand.u32 %v335, 2147483648
    %v348 = vor.u32 1.1754944e-38, %v347
    %v349 = vsel %vm346, %v348, %v344
    %v350 = vmul.f32 1.0, %v349
    %v351 = vadd.f32 %v328, %v206
    %353 = vrot.lane.b32.xlu0 %v351, 64
    %v354 = vpop.permute.xlu0 %353
    %v356 = vmul.f32 %v350, %v354
    %358 = vrot.lane.b32.xlu0 %v356, 64
    %v359 = vpop.permute.xlu0 %358
    %v361 = vadd.f32 %v140, %v359
    %v362 = vtanh.pop %v361
    %v363 = vsub.f32 1.0, %v350
    %365 = vrot.lane.b32.xlu0 %v362, 96
    %v366 = vpop.permute.xlu0 %365
    %v368 = vmul.f32 %v363, %v366
    %v369 = vrot.slane %v303, 4
    %v371 = vmul.f32 %v350, %v369
    %v372 = vadd.f32 %v368, %v371
    %374 = vrot.lane.b32.xlu0 %v372, 96
    %v375 = vpop.permute.xlu0 %374
    %377 = vst.msk [vmem:[#allocation2 + $0x8] sm:$0xf] %vm236, %v375
    %v378 = vpack.c.bf16 %v372, %v372
    %380 = vrot.lane.b32.xlu0 %v378, 96
    %v381 = vpop.permute.xlu0 %380
    %v383 = vsel %vm168, %v381, 0
    %385 = vmatpush.bf16.msra.mxu0 0
    %386 = vmatpush.bf16.msra.mxu0 0
    %387 = vmatpush.bf16.msra.mxu0 0
    %388 = vmatpush.bf16.msra.mxu0 0
    %389 = vmatpush.bf16.msra.mxu0 0
    %390 = vmatpush.bf16.msra.mxu0 0
    %391 = vmatpush.bf16.msra.mxu0 %v165
    %392 = vmatpush.bf16.msra.mxu0 %v164
    %393 = vmatmul.bf16.gmra.mxu0 %v383
    %v394 = vpop.f32.mrf.mxu0
    %v395 = vadd.f32 0.0, %v394
    %v396 = vpop.f32.mrf.mxu0
    %397 = vdwg.mxu0
    %v399 = vrot.slane %v395, 4
    %v401 = vadd.f32 %v140, %v399
    %v402 = vxor.u32 %v401, 2147483648
    %v403 = vmul.f32 %v402, 1.442695
    %v404 = vpow.pop %v403
    %v405 = vadd.f32 %v404, 1.0
    %v406 = vrcp.pop %v405
    %v407 = vmul.f32 %v405, %v406
    %v408 = vsub.f32 1.0, %v407
    %v409 = vmul.f32 %v406, %v408
    %v410 = vadd.f32 %v406, %v409
    %vm411 = vweird.f32 %v405
    %vm412 = vweird.f32 %v406
    %vm413 = vmor %vm411, %vm412
    %v414 = vsel %vm413, %v406, %v410
    %v415 = vand.u32 2147483647, %v405
    %vm416 = vcmp.eq.f32.partialorder %v415, 8.507059e+37
    %v417 = vand.u32 %v405, 2147483648
    %v418 = vor.u32 1.1754944e-38, %v417
    %v419 = vsel %vm416, %v418, %v414
    %v420 = vmul.f32 1.0, %v419
    %v421 = vadd.f32 %v395, %v206
    %v423 = vrot.slane %v421, 4
    %424 = vrot.lane.b32.xlu0 %v423, 64
    %v425 = vpop.permute.xlu0 %424
    %v427 = vmul.f32 %v420, %v425
    %429 = vrot.lane.b32.xlu0 %v427, 64
    %v430 = vpop.permute.xlu0 %429
    %v432 = vadd.f32 %v140, %v430
    %v433 = vtanh.pop %v432
    %v434 = vsub.f32 1.0, %v420
    %436 = vrot.lane.b32.xlu0 %v433, 96
    %v437 = vpop.permute.xlu0 %436
    %v439 = vmul.f32 %v434, %v437
    %v440 = vrot.slane %v372, 4
    %v442 = vmul.f32 %v420, %v440
    %v443 = vadd.f32 %v439, %v442
    %445 = vrot.lane.b32.xlu0 %v443, 96
    %v446 = vpop.permute.xlu0 %445
    %448 = vst.msk [vmem:[#allocation2 + $0x8] sm:$0xf0] %vm308, %v446
    %v449 = vpack.c.bf16 %v443, %v443
    %v451 = vrot.slane %v449, 2
    %452 = vrot.lane.b32.xlu0 %v451, 96
    %v453 = vpop.permute.xlu0 %452
    %v455 = vsel %vm168, %v453, 0
    %457 = vmatpush.bf16.msra.mxu0 0
    %458 = vmatpush.bf16.msra.mxu0 0
    %459 = vmatpush.bf16.msra.mxu0 0
    %460 = vmatpush.bf16.msra.mxu0 0
    %461 = vmatpush.bf16.msra.mxu0 0
    %462 = vmatpush.bf16.msra.mxu0 0
    %463 = vmatpush.bf16.msra.mxu0 %v165
    %464 = vmatpush.bf16.msra.mxu0 %v164
    %465 = vmatmul.bf16.gmra.mxu0 %v455
    %v466 = vpop.f32.mrf.mxu0
    %v467 = vadd.f32 0.0, %v466
    %v468 = vpop.f32.mrf.mxu0
    %469 = vdwg.mxu0
    %v470 = vadd.f32 %v143, %v467
    %v471 = vxor.u32 %v470, 2147483648
    %v472 = vmul.f32 %v471, 1.442695
    %v473 = vpow.pop %v472
    %v474 = vadd.f32 %v473, 1.0
    %v475 = vrcp.pop %v474
    %v476 = vmul.f32 %v474, %v475
    %v477 = vsub.f32 1.0, %v476
    %v478 = vmul.f32 %v475, %v477
    %v479 = vadd.f32 %v475, %v478
    %vm480 = vweird.f32 %v474
    %vm481 = vweird.f32 %v475
    %vm482 = vmor %vm480, %vm481
    %v483 = vsel %vm482, %v475, %v479
    %v484 = vand.u32 2147483647, %v474
    %vm485 = vcmp.eq.f32.partialorder %v484, 8.507059e+37
    %v486 = vand.u32 %v474, 2147483648
    %v487 = vor.u32 1.1754944e-38, %v486
    %v488 = vsel %vm485, %v487, %v483
    %v489 = vmul.f32 1.0, %v488
    %v490 = vadd.f32 %v467, %v206
    %492 = vrot.lane.b32.xlu0 %v490, 64
    %v493 = vpop.permute.xlu0 %492
    %v495 = vmul.f32 %v489, %v493
    %497 = vrot.lane.b32.xlu0 %v495, 64
    %v498 = vpop.permute.xlu0 %497
    %v500 = vadd.f32 %v143, %v498
    %v501 = vtanh.pop %v500
    %v502 = vsub.f32 1.0, %v489
    %504 = vrot.lane.b32.xlu0 %v501, 96
    %v505 = vpop.permute.xlu0 %504
    %v507 = vmul.f32 %v502, %v505
    %v508 = vrot.slane %v443, 4
    %v510 = vmul.f32 %v489, %v508
    %v511 = vadd.f32 %v507, %v510
    %513 = vrot.lane.b32.xlu0 %v511, 96
    %v514 = vpop.permute.xlu0 %513
    %516 = vst.msk [vmem:[#allocation2 + $0x10] sm:$0xf] %vm236, %v514
    %v517 = vpack.c.bf16 %v511, %v511
    %519 = vrot.lane.b32.xlu0 %v517, 96
    %v520 = vpop.permute.xlu0 %519
    %v522 = vsel %vm168, %v520, 0
    %524 = vmatpush.bf16.msra.mxu0 0
    %525 = vmatpush.bf16.msra.mxu0 0
    %526 = vmatpush.bf16.msra.mxu0 0
    %527 = vmatpush.bf16.msra.mxu0 0
    %528 = vmatpush.bf16.msra.mxu0 0
    %529 = vmatpush.bf16.msra.mxu0 0
    %530 = vmatpush.bf16.msra.mxu0 %v165
    %531 = vmatpush.bf16.msra.mxu0 %v164
    %532 = vmatmul.bf16.gmra.mxu0 %v522
    %v533 = vpop.f32.mrf.mxu0
    %v534 = vadd.f32 0.0, %v533
    %v535 = vpop.f32.mrf.mxu0
    %536 = vdwg.mxu0
    %v538 = vrot.slane %v534, 4
    %v540 = vadd.f32 %v143, %v538
    %v541 = vxor.u32 %v540, 2147483648
    %v542 = vmul.f32 %v541, 1.442695
    %v543 = vpow.pop %v542
    %v544 = vadd.f32 %v543, 1.0
    %v545 = vrcp.pop %v544
    %v546 = vmul.f32 %v544, %v545
    %v547 = vsub.f32 1.0, %v546
    %v548 = vmul.f32 %v545, %v547
    %v549 = vadd.f32 %v545, %v548
    %vm550 = vweird.f32 %v544
    %vm551 = vweird.f32 %v545
    %vm552 = vmor %vm550, %vm551
    %v553 = vsel %vm552, %v545, %v549
    %v554 = vand.u32 2147483647, %v544
    %vm555 = vcmp.eq.f32.partialorder %v554, 8.507059e+37
    %v556 = vand.u32 %v544, 2147483648
    %v557 = vor.u32 1.1754944e-38, %v556
    %v558 = vsel %vm555, %v557, %v553
    %v559 = vmul.f32 1.0, %v558
    %v560 = vadd.f32 %v534, %v206
    %v562 = vrot.slane %v560, 4
    %563 = vrot.lane.b32.xlu0 %v562, 64
    %v564 = vpop.permute.xlu0 %563
    %v566 = vmul.f32 %v559, %v564
    %568 = vrot.lane.b32.xlu0 %v566, 64
    %v569 = vpop.permute.xlu0 %568
    %v571 = vadd.f32 %v143, %v569
    %v572 = vtanh.pop %v571
    %v573 = vsub.f32 1.0, %v559
    %575 = vrot.lane.b32.xlu0 %v572, 96
    %v576 = vpop.permute.xlu0 %575
    %v578 = vmul.f32 %v573, %v576
    %v579 = vrot.slane %v511, 4
    %v581 = vmul.f32 %v559, %v579
    %v582 = vadd.f32 %v578, %v581
    %584 = vrot.lane.b32.xlu0 %v582, 96
    %v585 = vpop.permute.xlu0 %584
    %587 = vst.msk [vmem:[#allocation2 + $0x10] sm:$0xf0] %vm308, %v585
    %v588 = vpack.c.bf16 %v582, %v582
    %v590 = vrot.slane %v588, 2
    %591 = vrot.lane.b32.xlu0 %v590, 96
    %v592 = vpop.permute.xlu0 %591
    %v594 = vsel %vm168, %v592, 0
    %596 = vmatpush.bf16.msra.mxu0 0
    %597 = vmatpush.bf16.msra.mxu0 0
    %598 = vmatpush.bf16.msra.mxu0 0
    %599 = vmatpush.bf16.msra.mxu0 0
    %600 = vmatpush.bf16.msra.mxu0 0
    %601 = vmatpush.bf16.msra.mxu0 0
    %602 = vmatpush.bf16.msra.mxu0 %v165
    %603 = vmatpush.bf16.msra.mxu0 %v164
    %604 = vmatmul.bf16.gmra.mxu0 %v594
    %v605 = vpop.f32.mrf.mxu0
    %v606 = vadd.f32 0.0, %v605
    %v607 = vpop.f32.mrf.mxu0
    %608 = vdwg.mxu0
    %v609 = vadd.f32 %v145, %v606
    %v610 = vxor.u32 %v609, 2147483648
    %v611 = vmul.f32 %v610, 1.442695
    %v612 = vpow.pop %v611
    %v613 = vadd.f32 %v612, 1.0
    %v614 = vrcp.pop %v613
    %v615 = vmul.f32 %v613, %v614
    %v616 = vsub.f32 1.0, %v615
    %v617 = vmul.f32 %v614, %v616
    %v618 = vadd.f32 %v614, %v617
    %vm619 = vweird.f32 %v613
    %vm620 = vweird.f32 %v614
    %vm621 = vmor %vm619, %vm620
    %v622 = vsel %vm621, %v614, %v618
    %v623 = vand.u32 2147483647, %v613
    %vm624 = vcmp.eq.f32.partialorder %v623, 8.507059e+37
    %v625 = vand.u32 %v613, 2147483648
    %v626 = vor.u32 1.1754944e-38, %v625
    %v627 = vsel %vm624, %v626, %v622
    %v628 = vmul.f32 1.0, %v627
    %v629 = vadd.f32 %v606, %v206
    %631 = vrot.lane.b32.xlu0 %v629, 64
    %v632 = vpop.permute.xlu0 %631
    %v634 = vmul.f32 %v628, %v632
    %636 = vrot.lane.b32.xlu0 %v634, 64
    %v637 = vpop.permute.xlu0 %636
    %v639 = vadd.f32 %v145, %v637
    %v640 = vtanh.pop %v639
    %v641 = vsub.f32 1.0, %v628
    %643 = vrot.lane.b32.xlu0 %v640, 96
    %v644 = vpop.permute.xlu0 %643
    %v646 = vmul.f32 %v641, %v644
    %v647 = vrot.slane %v582, 4
    %v649 = vmul.f32 %v628, %v647
    %v650 = vadd.f32 %v646, %v649
    %652 = vrot.lane.b32.xlu0 %v650, 96
    %v653 = vpop.permute.xlu0 %652
    %655 = vst.msk [vmem:[#allocation2 + $0x18] sm:$0xf] %vm236, %v653
    %v656 = vpack.c.bf16 %v650, %v650
    %658 = vrot.lane.b32.xlu0 %v656, 96
    %v659 = vpop.permute.xlu0 %658
    %v661 = vsel %vm168, %v659, 0
    %663 = vmatpush.bf16.msra.mxu0 0
    %664 = vmatpush.bf16.msra.mxu0 0
    %665 = vmatpush.bf16.msra.mxu0 0
    %666 = vmatpush.bf16.msra.mxu0 0
    %667 = vmatpush.bf16.msra.mxu0 0
    %668 = vmatpush.bf16.msra.mxu0 0
    %669 = vmatpush.bf16.msra.mxu0 %v165
    %670 = vmatpush.bf16.msra.mxu0 %v164
    %671 = vmatmul.bf16.gmra.mxu0 %v661
    %v672 = vpop.f32.mrf.mxu0
    %v673 = vadd.f32 0.0, %v672
    %v674 = vpop.f32.mrf.mxu0
    %675 = vdwg.mxu0
    %v677 = vrot.slane %v673, 4
    %v679 = vadd.f32 %v145, %v677
    %v680 = vxor.u32 %v679, 2147483648
    %v681 = vmul.f32 %v680, 1.442695
    %v682 = vpow.pop %v681
    %v683 = vadd.f32 %v682, 1.0
    %v684 = vrcp.pop %v683
    %v685 = vmul.f32 %v683, %v684
    %v686 = vsub.f32 1.0, %v685
    %v687 = vmul.f32 %v684, %v686
    %v688 = vadd.f32 %v684, %v687
    %vm689 = vweird.f32 %v683
    %vm690 = vweird.f32 %v684
    %vm691 = vmor %vm689, %vm690
    %v692 = vsel %vm691, %v684, %v688
    %v693 = vand.u32 2147483647, %v683
    %vm694 = vcmp.eq.f32.partialorder %v693, 8.507059e+37
    %v695 = vand.u32 %v683, 2147483648
    %v696 = vor.u32 1.1754944e-38, %v695
    %v697 = vsel %vm694, %v696, %v692
    %v698 = vmul.f32 1.0, %v697
    %v699 = vadd.f32 %v673, %v206
    %v701 = vrot.slane %v699, 4
    %702 = vrot.lane.b32.xlu0 %v701, 64
    %v703 = vpop.permute.xlu0 %702
    %v705 = vmul.f32 %v698, %v703
    %707 = vrot.lane.b32.xlu0 %v705, 64
    %v708 = vpop.permute.xlu0 %707
    %v710 = vadd.f32 %v145, %v708
    %v711 = vtanh.pop %v710
    %v712 = vsub.f32 1.0, %v698
    %714 = vrot.lane.b32.xlu0 %v711, 96
    %v715 = vpop.permute.xlu0 %714
    %v717 = vmul.f32 %v712, %v715
    %v718 = vrot.slane %v650, 4
    %v720 = vmul.f32 %v698, %v718
    %v721 = vadd.f32 %v717, %v720
    %723 = vrot.lane.b32.xlu0 %v721, 96
    %v724 = vpop.permute.xlu0 %723
    %726 = vst.msk [vmem:[#allocation2 + $0x18] sm:$0xf0] %vm308, %v724
    %727 = vst.msk [vmem:[#allocation12 - $0x4] sm:$0xf0] %vm308, %v724
    %v728 = vld [vmem:[#allocation2] sm:$0xff]
    %v729 = vld [vmem:[#allocation2 + $0x8] sm:$0xff]
    %v730 = vld [vmem:[#allocation2 + $0x10] sm:$0xff]
    %v731 = vld [vmem:[#allocation2 + $0x18] sm:$0xff]
    %v732 = vpack.c.bf16 %v729, %v728
    %v733 = vpack.c.bf16 %v731, %v730
    %v734 = vld [vmem:[%s6] sm:$0xf]
    %v735 = vld [vmem:[%s6 + $0x4] sm:$0xf]
    %v736 = vld [vmem:[%s6 + $0x8] sm:$0xf]
    %v737 = vld [vmem:[%s6 + $0xc] sm:$0xf]
    %v738 = vld [vmem:[#allocation8] sm:$0x1]
    %v740 = vperm.slane %v738, 0
    %v746 = vunpack.c.l.b16 %v734
    %v747 = vunpack.c.l.b16 %v735
    %v748 = vunpack.c.l.b16 %v736
    %v749 = vunpack.c.l.b16 %v737
    %v750 = vpack.c.b16 %v747, %v746
    %v751 = vpack.c.b16 %v749, %v748
    %v755 = vsel %vm168, %v732, 0
    %v758 = vsel %vm168, %v733, 0
    %760 = vmatpush.bf16.msra.mxu0 0
    %761 = vmatpush.bf16.msra.mxu0 0
    %762 = vmatpush.bf16.msra.mxu0 0
    %763 = vmatpush.bf16.msra.mxu0 0
    %764 = vmatpush.bf16.msra.mxu0 0
    %765 = vmatpush.bf16.msra.mxu0 0
    %766 = vmatpush.bf16.msra.mxu0 %v751
    %767 = vmatpush.bf16.msra.mxu0 %v750
    %768 = vmatmul.bf16.gmra.mxu0 %v755
    %v769 = vpop.f32.mrf.mxu0
    %v770 = vadd.f32 %v740, %v769
    %v771 = vpop.f32.mrf.mxu0
    %v772 = vadd.f32 %v740, %v771
    %773 = vmatmul.bf16.gmra.mxu0 %v758
    %v774 = vpop.f32.mrf.mxu0
    %v775 = vadd.f32 %v740, %v774
    %v776 = vpop.f32.mrf.mxu0
    %v777 = vadd.f32 %v740, %v776
    %778 = vdwg.mxu0
    %v779 = vld [vmem:[%s7] sm:$0xf]
    %v780 = vld [vmem:[%s7 + $0x4] sm:$0xf]
    %v781 = vld [vmem:[%s7 + $0x8] sm:$0xf]
    %v782 = vld [vmem:[%s7 + $0xc] sm:$0xf]
    %v783 = vld [vmem:[#allocation9] sm:$0x1]
    %v785 = vperm.slane %v783, 0
    %s786 = scalar_lea.vmem %s1, 4
    %v787 = vld [vmem:[%s786] sm:$0xf]
    %v788 = vpack.c.bf16 %v787, %v787
    %v793 = vunpack.c.l.b16 %v779
    %v794 = vunpack.c.l.b16 %v780
    %v795 = vunpack.c.l.b16 %v781
    %v796 = vunpack.c.l.b16 %v782
    %v797 = vpack.c.b16 %v794, %v793
    %v798 = vpack.c.b16 %v796, %v795
    %v802 = vsel %vm168, %v788, 0
    %804 = vmatpush.bf16.msra.mxu0 0
    %805 = vmatpush.bf16.msra.mxu0 0
    %806 = vmatpush.bf16.msra.mxu0 0
    %807 = vmatpush.bf16.msra.mxu0 0
    %808 = vmatpush.bf16.msra.mxu0 0
    %809 = vmatpush.bf16.msra.mxu0 0
    %810 = vmatpush.bf16.msra.mxu0 %v798
    %811 = vmatpush.bf16.msra.mxu0 %v797
    %812 = vmatmul.bf16.gmra.mxu0 %v802
    %v813 = vpop.f32.mrf.mxu0
    %v814 = vadd.f32 0.0, %v813
    %v815 = vpop.f32.mrf.mxu0
    %816 = vdwg.mxu0
    %v817 = vadd.f32 %v770, %v814
    %v818 = vxor.u32 %v817, 2147483648
    %v819 = vmul.f32 %v818, 1.442695
    %v820 = vpow.pop %v819
    %v821 = vadd.f32 %v820, 1.0
    %v822 = vrcp.pop %v821
    %v823 = vmul.f32 %v821, %v822
    %v824 = vsub.f32 1.0, %v823
    %v825 = vmul.f32 %v822, %v824
    %v826 = vadd.f32 %v822, %v825
    %vm827 = vweird.f32 %v821
    %vm828 = vweird.f32 %v822
    %vm829 = vmor %vm827, %vm828
    %v830 = vsel %vm829, %v822, %v826
    %v831 = vand.u32 2147483647, %v821
    %vm832 = vcmp.eq.f32.partialorder %v831, 8.507059e+37
    %v833 = vand.u32 %v821, 2147483648
    %v834 = vor.u32 1.1754944e-38, %v833
    %v835 = vsel %vm832, %v834, %v830
    %v836 = vmul.f32 1.0, %v835
    %837 = vrot.lane.b32.xlu0 %v785, 64
    %v838 = vpop.permute.xlu0 %837
    %v840 = vadd.f32 %v814, %v838
    %842 = vrot.lane.b32.xlu0 %v840, 64
    %v843 = vpop.permute.xlu0 %842
    %v845 = vmul.f32 %v836, %v843
    %847 = vrot.lane.b32.xlu0 %v845, 64
    %v848 = vpop.permute.xlu0 %847
    %v850 = vadd.f32 %v770, %v848
    %v851 = vtanh.pop %v850
    %v852 = vsub.f32 1.0, %v836
    %854 = vrot.lane.b32.xlu0 %v851, 96
    %v855 = vpop.permute.xlu0 %854
    %v857 = vmul.f32 %v852, %v855
    %859 = vrot.lane.b32.xlu0 %v787, 32
    %v860 = vpop.permute.xlu0 %859
    %v862 = vmul.f32 %v836, %v860
    %v863 = vadd.f32 %v857, %v862
    %v864 = vpack.c.bf16 %v863, %v863
    %866 = vrot.lane.b32.xlu0 %v864, 96
    %v867 = vpop.permute.xlu0 %866
    %v869 = vsel %vm168, %v867, 0
    %871 = vmatpush.bf16.msra.mxu0 0
    %872 = vmatpush.bf16.msra.mxu0 0
    %873 = vmatpush.bf16.msra.mxu0 0
    %874 = vmatpush.bf16.msra.mxu0 0
    %875 = vmatpush.bf16.msra.mxu0 0
    %876 = vmatpush.bf16.msra.mxu0 0
    %877 = vmatpush.bf16.msra.mxu0 %v798
    %878 = vmatpush.bf16.msra.mxu0 %v797
    %879 = vmatmul.bf16.gmra.mxu0 %v869
    %v880 = vpop.f32.mrf.mxu0
    %v881 = vadd.f32 0.0, %v880
    %v882 = vpop.f32.mrf.mxu0
    %883 = vdwg.mxu0
    %v885 = vrot.slane %v881, 4
    %v887 = vadd.f32 %v770, %v885
    %v888 = vxor.u32 %v887, 2147483648
    %v889 = vmul.f32 %v888, 1.442695
    %v890 = vpow.pop %v889
    %v891 = vadd.f32 %v890, 1.0
    %v892 = vrcp.pop %v891
    %v893 = vmul.f32 %v891, %v892
    %v894 = vsub.f32 1.0, %v893
    %v895 = vmul.f32 %v892, %v894
    %v896 = vadd.f32 %v892, %v895
    %vm897 = vweird.f32 %v891
    %vm898 = vweird.f32 %v892
    %vm899 = vmor %vm897, %vm898
    %v900 = vsel %vm899, %v892, %v896
    %v901 = vand.u32 2147483647, %v891
    %vm902 = vcmp.eq.f32.partialorder %v901, 8.507059e+37
    %v903 = vand.u32 %v891, 2147483648
    %v904 = vor.u32 1.1754944e-38, %v903
    %v905 = vsel %vm902, %v904, %v900
    %v906 = vmul.f32 1.0, %v905
    %v907 = vadd.f32 %v881, %v838
    %v909 = vrot.slane %v907, 4
    %910 = vrot.lane.b32.xlu0 %v909, 64
    %v911 = vpop.permute.xlu0 %910
    %v913 = vmul.f32 %v906, %v911
    %915 = vrot.lane.b32.xlu0 %v913, 64
    %v916 = vpop.permute.xlu0 %915
    %v918 = vadd.f32 %v770, %v916
    %v919 = vtanh.pop %v918
    %v920 = vsub.f32 1.0, %v906
    %922 = vrot.lane.b32.xlu0 %v919, 96
    %v923 = vpop.permute.xlu0 %922
    %v925 = vmul.f32 %v920, %v923
    %v927 = vrot.slane %v863, 4
    %v929 = vmul.f32 %v906, %v927
    %v930 = vadd.f32 %v925, %v929
    %v931 = vpack.c.bf16 %v930, %v930
    %v933 = vrot.slane %v931, 2
    %934 = vrot.lane.b32.xlu0 %v933, 96
    %v935 = vpop.permute.xlu0 %934
    %v937 = vsel %vm168, %v935, 0
    %939 = vmatpush.bf16.msra.mxu0 0
    %940 = vmatpush.bf16.msra.mxu0 0
    %941 = vmatpush.bf16.msra.mxu0 0
    %942 = vmatpush.bf16.msra.mxu0 0
    %943 = vmatpush.bf16.msra.mxu0 0
    %944 = vmatpush.bf16.msra.mxu0 0
    %945 = vmatpush.bf16.msra.mxu0 %v798
    %946 = vmatpush.bf16.msra.mxu0 %v797
    %947 = vmatmul.bf16.gmra.mxu0 %v937
    %v948 = vpop.f32.mrf.mxu0
    %v949 = vadd.f32 0.0, %v948
    %v950 = vpop.f32.mrf.mxu0
    %951 = vdwg.mxu0
    %v952 = vadd.f32 %v772, %v949
    %v953 = vxor.u32 %v952, 2147483648
    %v954 = vmul.f32 %v953, 1.442695
    %v955 = vpow.pop %v954
    %v956 = vadd.f32 %v955, 1.0
    %v957 = vrcp.pop %v956
    %v958 = vmul.f32 %v956, %v957
    %v959 = vsub.f32 1.0, %v958
    %v960 = vmul.f32 %v957, %v959
    %v961 = vadd.f32 %v957, %v960
    %vm962 = vweird.f32 %v956
    %vm963 = vweird.f32 %v957
    %vm964 = vmor %vm962, %vm963
    %v965 = vsel %vm964, %v957, %v961
    %v966 = vand.u32 2147483647, %v956
    %vm967 = vcmp.eq.f32.partialorder %v966, 8.507059e+37
    %v968 = vand.u32 %v956, 2147483648
    %v969 = vor.u32 1.1754944e-38, %v968
    %v970 = vsel %vm967, %v969, %v965
    %v971 = vmul.f32 1.0, %v970
    %v972 = vadd.f32 %v949, %v838
    %974 = vrot.lane.b32.xlu0 %v972, 64
    %v975 = vpop.permute.xlu0 %974
    %v977 = vmul.f32 %v971, %v975
    %979 = vrot.lane.b32.xlu0 %v977, 64
    %v980 = vpop.permute.xlu0 %979
    %v982 = vadd.f32 %v772, %v980
    %v983 = vtanh.pop %v982
    %v984 = vsub.f32 1.0, %v971
    %986 = vrot.lane.b32.xlu0 %v983, 96
    %v987 = vpop.permute.xlu0 %986
    %v989 = vmul.f32 %v984, %v987
    %v991 = vrot.slane %v930, 4
    %v993 = vmul.f32 %v971, %v991
    %v994 = vadd.f32 %v989, %v993
    %v995 = vpack.c.bf16 %v994, %v994
    %997 = vrot.lane.b32.xlu0 %v995, 96
    %v998 = vpop.permute.xlu0 %997
    %v1000 = vsel %vm168, %v998, 0
    %1002 = vmatpush.bf16.msra.mxu0 0
    %1003 = vmatpush.bf16.msra.mxu0 0
    %1004 = vmatpush.bf16.msra.mxu0 0
    %1005 = vmatpush.bf16.msra.mxu0 0
    %1006 = vmatpush.bf16.msra.mxu0 0
    %1007 = vmatpush.bf16.msra.mxu0 0
    %1008 = vmatpush.bf16.msra.mxu0 %v798
    %1009 = vmatpush.bf16.msra.mxu0 %v797
    %1010 = vmatmul.bf16.gmra.mxu0 %v1000
    %v1011 = vpop.f32.mrf.mxu0
    %v1012 = vadd.f32 0.0, %v1011
    %v1013 = vpop.f32.mrf.mxu0
    %1014 = vdwg.mxu0
    %v1016 = vrot.slane %v1012, 4
    %v1018 = vadd.f32 %v772, %v1016
    %v1019 = vxor.u32 %v1018, 2147483648
    %v1020 = vmul.f32 %v1019, 1.442695
    %v1021 = vpow.pop %v1020
    %v1022 = vadd.f32 %v1021, 1.0
    %v1023 = vrcp.pop %v1022
    %v1024 = vmul.f32 %v1022, %v1023
    %v1025 = vsub.f32 1.0, %v1024
    %v1026 = vmul.f32 %v1023, %v1025
    %v1027 = vadd.f32 %v1023, %v1026
    %vm1028 = vweird.f32 %v1022
    %vm1029 = vweird.f32 %v1023
    %vm1030 = vmor %vm1028, %vm1029
    %v1031 = vsel %vm1030, %v1023, %v1027
    %v1032 = vand.u32 2147483647, %v1022
    %vm1033 = vcmp.eq.f32.partialorder %v1032, 8.507059e+37
    %v1034 = vand.u32 %v1022, 2147483648
    %v1035 = vor.u32 1.1754944e-38, %v1034
    %v1036 = vsel %vm1033, %v1035, %v1031
    %v1037 = vmul.f32 1.0, %v1036
    %v1038 = vadd.f32 %v1012, %v838
    %v1040 = vrot.slane %v1038, 4
    %1041 = vrot.lane.b32.xlu0 %v1040, 64
    %v1042 = vpop.permute.xlu0 %1041
    %v1044 = vmul.f32 %v1037, %v1042
    %1046 = vrot.lane.b32.xlu0 %v1044, 64
    %v1047 = vpop.permute.xlu0 %1046
    %v1049 = vadd.f32 %v772, %v1047
    %v1050 = vtanh.pop %v1049
    %v1051 = vsub.f32 1.0, %v1037
    %1053 = vrot.lane.b32.xlu0 %v1050, 96
    %v1054 = vpop.permute.xlu0 %1053
    %v1056 = vmul.f32 %v1051, %v1054
    %v1058 = vrot.slane %v994, 4
    %v1060 = vmul.f32 %v1037, %v1058
    %v1061 = vadd.f32 %v1056, %v1060
    %v1062 = vpack.c.bf16 %v1061, %v1061
    %v1064 = vrot.slane %v1062, 2
    %1065 = vrot.lane.b32.xlu0 %v1064, 96
    %v1066 = vpop.permute.xlu0 %1065
    %v1068 = vsel %vm168, %v1066, 0
    %1070 = vmatpush.bf16.msra.mxu0 0
    %1071 = vmatpush.bf16.msra.mxu0 0
    %1072 = vmatpush.bf16.msra.mxu0 0
    %1073 = vmatpush.bf16.msra.mxu0 0
    %1074 = vmatpush.bf16.msra.mxu0 0
    %1075 = vmatpush.bf16.msra.mxu0 0
    %1076 = vmatpush.bf16.msra.mxu0 %v798
    %1077 = vmatpush.bf16.msra.mxu0 %v797
    %1078 = vmatmul.bf16.gmra.mxu0 %v1068
    %v1079 = vpop.f32.mrf.mxu0
    %v1080 = vadd.f32 0.0, %v1079
    %v1081 = vpop.f32.mrf.mxu0
    %1082 = vdwg.mxu0
    %v1083 = vadd.f32 %v775, %v1080
    %v1084 = vxor.u32 %v1083, 2147483648
    %v1085 = vmul.f32 %v1084, 1.442695
    %v1086 = vpow.pop %v1085
    %v1087 = vadd.f32 %v1086, 1.0
    %v1088 = vrcp.pop %v1087
    %v1089 = vmul.f32 %v1087, %v1088
    %v1090 = vsub.f32 1.0, %v1089
    %v1091 = vmul.f32 %v1088, %v1090
    %v1092 = vadd.f32 %v1088, %v1091
    %vm1093 = vweird.f32 %v1087
    %vm1094 = vweird.f32 %v1088
    %vm1095 = vmor %vm1093, %vm1094
    %v1096 = vsel %vm1095, %v1088, %v1092
    %v1097 = vand.u32 2147483647, %v1087
    %vm1098 = vcmp.eq.f32.partialorder %v1097, 8.507059e+37
    %v1099 = vand.u32 %v1087, 2147483648
    %v1100 = vor.u32 1.1754944e-38, %v1099
    %v1101 = vsel %vm1098, %v1100, %v1096
    %v1102 = vmul.f32 1.0, %v1101
    %v1103 = vadd.f32 %v1080, %v838
    %1105 = vrot.lane.b32.xlu0 %v1103, 64
    %v1106 = vpop.permute.xlu0 %1105
    %v1108 = vmul.f32 %v1102, %v1106
    %1110 = vrot.lane.b32.xlu0 %v1108, 64
    %v1111 = vpop.permute.xlu0 %1110
    %v1113 = vadd.f32 %v775, %v1111
    %v1114 = vtanh.pop %v1113
    %v1115 = vsub.f32 1.0, %v1102
    %1117 = vrot.lane.b32.xlu0 %v1114, 96
    %v1118 = vpop.permute.xlu0 %1117
    %v1120 = vmul.f32 %v1115, %v1118
    %v1122 = vrot.slane %v1061, 4
    %v1124 = vmul.f32 %v1102, %v1122
    %v1125 = vadd.f32 %v1120, %v1124
    %v1126 = vpack.c.bf16 %v1125, %v1125
    %1128 = vrot.lane.b32.xlu0 %v1126, 96
    %v1129 = vpop.permute.xlu0 %1128
    %v1131 = vsel %vm168, %v1129, 0
    %1133 = vmatpush.bf16.msra.mxu0 0
    %1134 = vmatpush.bf16.msra.mxu0 0
    %1135 = vmatpush.bf16.msra.mxu0 0
    %1136 = vmatpush.bf16.msra.mxu0 0
    %1137 = vmatpush.bf16.msra.mxu0 0
    %1138 = vmatpush.bf16.msra.mxu0 0
    %1139 = vmatpush.bf16.msra.mxu0 %v798
    %1140 = vmatpush.bf16.msra.mxu0 %v797
    %1141 = vmatmul.bf16.gmra.mxu0 %v1131
    %v1142 = vpop.f32.mrf.mxu0
    %v1143 = vadd.f32 0.0, %v1142
    %v1144 = vpop.f32.mrf.mxu0
    %1145 = vdwg.mxu0
    %v1147 = vrot.slane %v1143, 4
    %v1149 = vadd.f32 %v775, %v1147
    %v1150 = vxor.u32 %v1149, 2147483648
    %v1151 = vmul.f32 %v1150, 1.442695
    %v1152 = vpow.pop %v1151
    %v1153 = vadd.f32 %v1152, 1.0
    %v1154 = vrcp.pop %v1153
    %v1155 = vmul.f32 %v1153, %v1154
    %v1156 = vsub.f32 1.0, %v1155
    %v1157 = vmul.f32 %v1154, %v1156
    %v1158 = vadd.f32 %v1154, %v1157
    %vm1159 = vweird.f32 %v1153
    %vm1160 = vweird.f32 %v1154
    %vm1161 = vmor %vm1159, %vm1160
    %v1162 = vsel %vm1161, %v1154, %v1158
    %v1163 = vand.u32 2147483647, %v1153
    %vm1164 = vcmp.eq.f32.partialorder %v1163, 8.507059e+37
    %v1165 = vand.u32 %v1153, 2147483648
    %v1166 = vor.u32 1.1754944e-38, %v1165
    %v1167 = vsel %vm1164, %v1166, %v1162
    %v1168 = vmul.f32 1.0, %v1167
    %v1169 = vadd.f32 %v1143, %v838
    %v1171 = vrot.slane %v1169, 4
    %1172 = vrot.lane.b32.xlu0 %v1171, 64
    %v1173 = vpop.permute.xlu0 %1172
    %v1175 = vmul.f32 %v1168, %v1173
    %1177 = vrot.lane.b32.xlu0 %v1175, 64
    %v1178 = vpop.permute.xlu0 %1177
    %v1180 = vadd.f32 %v775, %v1178
    %v1181 = vtanh.pop %v1180
    %v1182 = vsub.f32 1.0, %v1168
    %1184 = vrot.lane.b32.xlu0 %v1181, 96
    %v1185 = vpop.permute.xlu0 %1184
    %v1187 = vmul.f32 %v1182, %v1185
    %v1189 = vrot.slane %v1125, 4
    %v1191 = vmul.f32 %v1168, %v1189
    %v1192 = vadd.f32 %v1187, %v1191
    %v1193 = vpack.c.bf16 %v1192, %v1192
    %v1195 = vrot.slane %v1193, 2
    %1196 = vrot.lane.b32.xlu0 %v1195, 96
    %v1197 = vpop.permute.xlu0 %1196
    %v1199 = vsel %vm168, %v1197, 0
    %1201 = vmatpush.bf16.msra.mxu0 0
    %1202 = vmatpush.bf16.msra.mxu0 0
    %1203 = vmatpush.bf16.msra.mxu0 0
    %1204 = vmatpush.bf16.msra.mxu0 0
    %1205 = vmatpush.bf16.msra.mxu0 0
    %1206 = vmatpush.bf16.msra.mxu0 0
    %1207 = vmatpush.bf16.msra.mxu0 %v798
    %1208 = vmatpush.bf16.msra.mxu0 %v797
    %1209 = vmatmul.bf16.gmra.mxu0 %v1199
    %v1210 = vpop.f32.mrf.mxu0
    %v1211 = vadd.f32 0.0, %v1210
    %v1212 = vpop.f32.mrf.mxu0
    %1213 = vdwg.mxu0
    %v1214 = vadd.f32 %v777, %v1211
    %v1215 = vxor.u32 %v1214, 2147483648
    %v1216 = vmul.f32 %v1215, 1.442695
    %v1217 = vpow.pop %v1216
    %v1218 = vadd.f32 %v1217, 1.0
    %v1219 = vrcp.pop %v1218
    %v1220 = vmul.f32 %v1218, %v1219
    %v1221 = vsub.f32 1.0, %v1220
    %v1222 = vmul.f32 %v1219, %v1221
    %v1223 = vadd.f32 %v1219, %v1222
    %vm1224 = vweird.f32 %v1218
    %vm1225 = vweird.f32 %v1219
    %vm1226 = vmor %vm1224, %vm1225
    %v1227 = vsel %vm1226, %v1219, %v1223
    %v1228 = vand.u32 2147483647, %v1218
    %vm1229 = vcmp.eq.f32.partialorder %v1228, 8.507059e+37
    %v1230 = vand.u32 %v1218, 2147483648
    %v1231 = vor.u32 1.1754944e-38, %v1230
    %v1232 = vsel %vm1229, %v1231, %v1227
    %v1233 = vmul.f32 1.0, %v1232
    %v1234 = vadd.f32 %v1211, %v838
    %1236 = vrot.lane.b32.xlu0 %v1234, 64
    %v1237 = vpop.permute.xlu0 %1236
    %v1239 = vmul.f32 %v1233, %v1237
    %1241 = vrot.lane.b32.xlu0 %v1239, 64
    %v1242 = vpop.permute.xlu0 %1241
    %v1244 = vadd.f32 %v777, %v1242
    %v1245 = vtanh.pop %v1244
    %v1246 = vsub.f32 1.0, %v1233
    %1248 = vrot.lane.b32.xlu0 %v1245, 96
    %v1249 = vpop.permute.xlu0 %1248
    %v1251 = vmul.f32 %v1246, %v1249
    %v1253 = vrot.slane %v1192, 4
    %v1255 = vmul.f32 %v1233, %v1253
    %v1256 = vadd.f32 %v1251, %v1255
    %v1257 = vpack.c.bf16 %v1256, %v1256
    %1259 = vrot.lane.b32.xlu0 %v1257, 96
    %v1260 = vpop.permute.xlu0 %1259
    %v1262 = vsel %vm168, %v1260, 0
    %1264 = vmatpush.bf16.msra.mxu0 0
    %1265 = vmatpush.bf16.msra.mxu0 0
    %1266 = vmatpush.bf16.msra.mxu0 0
    %1267 = vmatpush.bf16.msra.mxu0 0
    %1268 = vmatpush.bf16.msra.mxu0 0
    %1269 = vmatpush.bf16.msra.mxu0 0
    %1270 = vmatpush.bf16.msra.mxu0 %v798
    %1271 = vmatpush.bf16.msra.mxu0 %v797
    %1272 = vmatmul.bf16.gmra.mxu0 %v1262
    %v1273 = vpop.f32.mrf.mxu0
    %v1274 = vadd.f32 0.0, %v1273
    %v1275 = vpop.f32.mrf.mxu0
    %1276 = vdwg.mxu0
    %v1278 = vrot.slane %v1274, 4
    %v1280 = vadd.f32 %v777, %v1278
    %v1281 = vxor.u32 %v1280, 2147483648
    %v1282 = vmul.f32 %v1281, 1.442695
    %v1283 = vpow.pop %v1282
    %v1284 = vadd.f32 %v1283, 1.0
    %v1285 = vrcp.pop %v1284
    %v1286 = vmul.f32 %v1284, %v1285
    %v1287 = vsub.f32 1.0, %v1286
    %v1288 = vmul.f32 %v1285, %v1287
    %v1289 = vadd.f32 %v1285, %v1288
    %vm1290 = vweird.f32 %v1284
    %vm1291 = vweird.f32 %v1285
    %vm1292 = vmor %vm1290, %vm1291
    %v1293 = vsel %vm1292, %v1285, %v1289
    %v1294 = vand.u32 2147483647, %v1284
    %vm1295 = vcmp.eq.f32.partialorder %v1294, 8.507059e+37
    %v1296 = vand.u32 %v1284, 2147483648
    %v1297 = vor.u32 1.1754944e-38, %v1296
    %v1298 = vsel %vm1295, %v1297, %v1293
    %v1299 = vmul.f32 1.0, %v1298
    %v1300 = vadd.f32 %v1274, %v838
    %v1302 = vrot.slane %v1300, 4
    %1303 = vrot.lane.b32.xlu0 %v1302, 64
    %v1304 = vpop.permute.xlu0 %1303
    %v1306 = vmul.f32 %v1299, %v1304
    %1308 = vrot.lane.b32.xlu0 %v1306, 64
    %v1309 = vpop.permute.xlu0 %1308
    %v1311 = vadd.f32 %v777, %v1309
    %v1312 = vtanh.pop %v1311
    %v1313 = vsub.f32 1.0, %v1299
    %1315 = vrot.lane.b32.xlu0 %v1312, 96
    %v1316 = vpop.permute.xlu0 %1315
    %v1318 = vmul.f32 %v1313, %v1316
    %v1320 = vrot.slane %v1256, 4
    %v1322 = vmul.f32 %v1299, %v1320
    %v1323 = vadd.f32 %v1318, %v1322
    %1325 = vrot.lane.b32.xlu0 %v1323, 96
    %v1326 = vpop.permute.xlu0 %1325
    %s1328 = scalar_lea.vmem [#allocation12], 4
    %1329 = vst.msk [vmem:[%s1328 - $0x4] sm:$0xf0] %vm308, %v1326
    %v1330 = vrot.slane %v863, 3
    %v1332 = vrot.slane %v930, 6
    %v1334 = vrot.slane %v994, 1
    %v1336 = vrot.slane %v1125, 7
    %v1338 = vrot.slane %v1192, 2
    %v1340 = vrot.slane %v1256, 5
    %vm1342 = vcmask 1040384
    %v1343 = vsel %vm1342, %v1330, %v1332
    %vm1344 = vcmask 1041408
    %v1345 = vsel %vm1344, %v1343, %v1334
    %vm1346 = vcmask 1042432
    %v1347 = vsel %vm1346, %v1345, %v1122
    %vm1348 = vcmask 1043456
    %v1349 = vsel %vm1348, %v1347, %v1336
    %vm1350 = vcmask 1044480
    %v1351 = vsel %vm1350, %v1349, %v1338
    %vm1352 = vcmask 1045504
    %v1353 = vsel %vm1352, %v1351, %v1340
    %vm1354 = vcmask 1046528
    %v1355 = vsel %vm1354, %v1353, %v1323
    %v1356 = vpack.c.bf16 %v1355, %v1355
    %v1357 = vld [vmem:[%s10] sm:$0xf]
    %v1358 = vld [vmem:[%s10 + $0x4] sm:$0xf]
    %v1359 = vld [vmem:[%s10 + $0x8] sm:$0xf]
    %v1360 = vld [vmem:[%s10 + $0xc] sm:$0xf]
    %v1361 = vld [vmem:[%s11] sm:$0x1]
    %v1363 = vperm.slane %v1361, 0
    %1366 = vrot.lane.b32.xlu0 %v1356, 96
    %v1367 = vpop.permute.xlu0 %1366
    %v1372 = vunpack.c.l.b16 %v1357
    %v1373 = vunpack.c.l.b16 %v1358
    %v1374 = vunpack.c.l.b16 %v1359
    %v1375 = vunpack.c.l.b16 %v1360
    %v1376 = vpack.c.b16 %v1373, %v1372
    %v1377 = vpack.c.b16 %v1375, %v1374
    %v1381 = vsel %vm168, %v1367, 0
    %1383 = vmatpush.bf16.msra.mxu0 0
    %1384 = vmatpush.bf16.msra.mxu0 0
    %1385 = vmatpush.bf16.msra.mxu0 0
    %1386 = vmatpush.bf16.msra.mxu0 0
    %1387 = vmatpush.bf16.msra.mxu0 0
    %1388 = vmatpush.bf16.msra.mxu0 0
    %1389 = vmatpush.bf16.msra.mxu0 %v1377
    %1390 = vmatpush.bf16.msra.mxu0 %v1376
    %1391 = vmatmul.bf16.gmra.mxu0 %v1381
    %v1392 = vpop.f32.mrf.mxu0
    %v1393 = vadd.f32 %v1363, %v1392
    %v1394 = vpop.f32.mrf.mxu0
    %1395 = vdwg.mxu0
    %vm1396 = vcmask 80896
    %v1397 = vsel %vm1396, %v1393, -inf
    %1398 = vmax.xlane.f32.xlu0 %v1397
    %v1399 = vpop.xlane.xlu0 %1398
    %v1400 = vsub.f32 %v1393, %v1399
    %v1401 = vmul.f32 %v1400, 1.442695
    %v1402 = vpow.pop %v1401
    %v1403 = vsel %vm1396, %v1402, 0.0
    %1404 = vadd.xlane.f32.xlu0 %v1403
    %v1405 = vpop.xlane.xlu0 %1404
    %v1406 = vlog2.pop %v1405
    %v1407 = vmul.f32 %v1406, 0.6931472
    %v1408 = vadd.f32 %v1407, %v1399
    %v1409 = vsub.f32 %v1393, %v1408
    %1410 = vst.msk [vmem:[#allocation11] sm:$0xff] %vm1396, %v1409
    // Predicated region
    $region66: #{tpu_custom_call.1} parent=1 // pred_check
      _
    $region67: #{tpu_custom_call.1} parent=1 // pred_check_branch
      %1412 = sbr.rel (0) target = $region69
    $region68: #{tpu_custom_call.1} parent=1 // pred_region
      %1414 = vsyncadd [#allocation5], 0
      %s1416 = sshll.u32 [#allocation11], 4
      %s1417 = int_to_ptr.vmem [resolvable:$true] %s1416
      %s1418 = sshll.u32 %s12, 4
      %s1419 = int_to_ptr.hbm [resolvable:$true] %s1418
      %1421 = dma.vmem_to_hbm [thread:$0]  %s1417, 128, %s1419, [#allocation5]
    $region69: #{tpu_custom_call.1} parent=1 // pred_fallthru
      _
    // Predicated region
    $region70: #{tpu_custom_call.1} parent=1 // pred_check
      _
    $region71: #{tpu_custom_call.1} parent=1 // pred_check_branch
      %1423 = sbr.rel (0) target = $region73
    $region72: #{tpu_custom_call.1} parent=1 // pred_region
      %1425 = vsyncadd [#allocation13], 0
      %s1426 = sshll.u32 [#allocation12], 4
      %s1427 = int_to_ptr.vmem [resolvable:$true] %s1426
      %s1428 = sshll.u32 %s13, 4
      %s1429 = int_to_ptr.hbm [resolvable:$true] %s1428
      %1434 = dma.vmem_to_hbm [thread:$0]  %s1427, 128, %s1429, [#allocation13], 64, 64, 4
    $region73: #{tpu_custom_call.1} parent=1 // pred_fallthru
      _
    // Predicated region
    $region74: #{tpu_custom_call.1} parent=1 // pred_check
      _
    $region75: #{tpu_custom_call.1} parent=1 // pred_check_branch
      %1436 = sbr.rel (0) target = $region77
    $region76: #{tpu_custom_call.1} parent=1 // pred_region
      %1438 = dma.done [#allocation5], 128
    $region77: #{tpu_custom_call.1} parent=1 // pred_fallthru
      _
    // Predicated region
    $region78: #{tpu_custom_call.1} parent=1 // pred_check
      _
    $region79: #{tpu_custom_call.1} parent=1 // pred_check_branch
      %1440 = sbr.rel (0) target = $region81
    $region80: #{tpu_custom_call.1} parent=1 // pred_region
      %1442 = dma.done [#allocation13], 128
    $region81: #{tpu_custom_call.1} parent=1 // pred_fallthru
      _
    %1443 = vsyncpa [#allocation4], 1
    %1444 = vsyncpa [#allocation7], 1
    %1445 = vsyncpa [#allocation10], 1
    %1446 = vsyncpa [#allocation5], 1
    %1447 = vsyncpa [#allocation13], 1

</llo_original>
